<compile_context>
chip_gen: v6e
topology: v6e:2x2x1
jax: 0.10.0
libtpu: 0.0.40
codegen_flags: <defaults>
</compile_context>

<pallas_src>
import functools

import jax
import jax.numpy as jnp
from jax.experimental import pallas as pl
from jax.experimental.pallas import tpu as pltpu


def _attn_block_kernel(x_ref, sig_ref, mu_ref,
                       wq_ref, wk_ref, wv_ref, wo_ref,
                       bq_ref, bk_ref, bv_ref, bo_ref,
                       mask_ref, rz_ref, out_ref, *, num_heads, head_dim):
    """Block = (bb, C, S) channel-major sequences (bb batch elements per step)."""
    bb, C, S = x_ref.shape
    scale = 1.0 / (head_dim ** 0.5)

    # Hoist shared parameter loads out of the per-batch loop.
    wq = wq_ref[...]; wk = wk_ref[...]; wv = wv_ref[...]; wo = wo_ref[...]
    bq = bq_ref[...]; bk = bk_ref[...]; bv = bv_ref[...]; bo = bo_ref[...]
    mask = mask_ref[...]                       # (C, H*S) 0/1 head-block mask
    rz = rz_ref[0, 0]

    def mm(a, b):        # (M, K) @ (K, N)
        return jax.lax.dot_general(a, b, (((1,), (0,)), ((), ())),
                                   preferred_element_type=jnp.float32)

    def mm_tb(a, b):     # (M, K) x (N, K) -> (M, N)  (contract trailing dims)
        return jax.lax.dot_general(a, b, (((1,), (1,)), ((), ())),
                                   preferred_element_type=jnp.float32)

    for b in range(bb):                         # static unroll; bb is 1 or 2
        x_cs = x_ref[b]                         # (C, S) pre-norm x (residual)

        # --- StyleIN over the sequence (lane) axis; unbiased var (torch.var_mean).
        mean = jnp.mean(x_cs, axis=1, keepdims=True)
        d = x_cs - mean
        var = jnp.sum(d * d, axis=1, keepdims=True) * (1.0 / (S - 1))
        h = d * jax.lax.rsqrt(var + 1e-6)
        h = h * sig_ref[b] + mu_ref[b]          # (C, 1) style params, broadcast over S
        h = jnp.maximum(h, 0.0)                 # ReLU

        # --- QKV projections, channel-major: q^T = Wq @ h (weights are (out, in)).
        # 1/sqrt(head_dim) is folded into q once (PyTorch scales q incl. its bias).
        qT = (mm(wq, h) + bq) * scale           # (C, S)
        kT = mm(wk, h) + bk                     # (C, S)
        vT = mm(wv, h) + bv                     # (C, S)

        # --- All heads at once: replicate K/V along the packed head*key lane axis
        # and zero off-head channels (block-diagonal packing).
        k_blk = jnp.concatenate([kT] * num_heads, axis=1) * mask     # (C, H*S)
        v_blk = jnp.concatenate([vT] * num_heads, axis=1) * mask     # (C, H*S)

        q_sc = qT.T                             # (S, C) -- one small 2-D transpose
        s = mm(q_sc, k_blk)                     # (S, H*S): all heads' score tiles
        # The per-row max is constant within every head segment of the row, so it
        # is a valid softmax shift for each (query, head) pair.
        s = s - jnp.max(s, axis=-1, keepdims=True)
        p = jnp.exp(s)                          # EUP
        o_un = mm_tb(v_blk, p)                  # (C, S) unnormalized per-head outputs
        den = mm_tb(mask, p)                    # (C, S) per-(head, query) softmax denom
        oT = o_un * pl.reciprocal(den, approx=True)

        # --- Output projection + rezero residual against the pre-norm x.
        outT = mm(wo, oT) + bo                  # (C, S)
        out_ref[b] = outT * rz + x_cs
        # TODO(synk): for large S (>= ~1024) switch the score/softmax stage to a
        # KV-tiled online-softmax loop instead of materializing (S, H*S) scores
        # (v7x has only 64 MiB VMEM), and feed bf16 MXU inputs on v6e/v7x.


def _default_grid_blocks(batch):
    """One grid step on single-TC chips (v5e/v6e); two parallel steps on v7x."""
    try:
        kind = jax.devices()[0].device_kind.lower()
    except Exception:  # pragma: no cover - be robust to odd backends
        kind = ""
    cores = 2 if "v7" in kind else 1
    g = min(batch, cores)
    while g > 1 and batch % g != 0:
        g -= 1
    return max(g, 1)


def auto_convert_attn_block(x, y, params, *, num_heads, recover_shape=True,
                            grid_blocks=None):
    """x: (B, C, H, W) float32 NCHW.  y: (B,) int32 style ids.

    Weights are in PyTorch (out_features, in_features) orientation.
    """
    B, C, H, W = x.shape
    S = H * W
    assert C % num_heads == 0
    assert S > 1, "unbiased variance in StyleIN requires at least 2 spatial positions"
    head_dim = C // num_heads

    if grid_blocks is None:
        grid_blocks = _default_grid_blocks(B)
    bb = B // grid_blocks

    # NCHW -> (B, C, S): a free reshape, no transpose / extra HBM traffic.
    x_cs = x.reshape(B, C, S).astype(jnp.float32)

    # Per-batch style params as (C, 1) columns (broadcast over the sequence lanes).
    sig = params["sigma"][y].reshape(B, C, 1).astype(jnp.float32)
    mu = params["mu"][y].reshape(B, C, 1).astype(jnp.float32)

    wq = params["wq"].astype(jnp.float32)
    wk = params["wk"].astype(jnp.float32)
    wv = params["wv"].astype(jnp.float32)
    wo = params["wo"].astype(jnp.float32)
    bq = params["bq"].reshape(C, 1).astype(jnp.float32)
    bk = params["bk"].reshape(C, 1).astype(jnp.float32)
    bv = params["bv"].reshape(C, 1).astype(jnp.float32)
    bo = params["bo"].reshape(C, 1).astype(jnp.float32)
    rz = params["rezero"].reshape(1, 1).astype(jnp.float32)

    # Head-block mask: mask[c, h*S + k] = 1 iff channel c belongs to head h.
    c_head = (jnp.arange(C, dtype=jnp.int32) // head_dim)[:, None]           # (C, 1)
    j_head = (jnp.arange(num_heads * S, dtype=jnp.int32) // S)[None, :]      # (1, H*S)
    mask = (c_head == j_head).astype(jnp.float32)                            # (C, H*S)

    kernel = functools.partial(_attn_block_kernel,
                               num_heads=num_heads, head_dim=head_dim)

    x_spec = pl.BlockSpec((bb, C, S), lambda b: (b, 0, 0))
    sm_spec = pl.BlockSpec((bb, C, 1), lambda b: (b, 0, 0))
    w_spec = pl.BlockSpec((C, C), lambda b: (0, 0))
    b_spec = pl.BlockSpec((C, 1), lambda b: (0, 0))
    m_spec = pl.BlockSpec((C, num_heads * S), lambda b: (0, 0))
    r_spec = pl.BlockSpec((1, 1), lambda b: (0, 0))

    out_cs = pl.pallas_call(
        kernel,
        out_shape=jax.ShapeDtypeStruct((B, C, S), jnp.float32),
        grid=(grid_blocks,),
        in_specs=[x_spec, sm_spec, sm_spec,
                  w_spec, w_spec, w_spec, w_spec,
                  b_spec, b_spec, b_spec, b_spec,
                  m_spec, r_spec],
        out_specs=x_spec,
        compiler_params=pltpu.CompilerParams(dimension_semantics=("parallel",)),
    )(x_cs, sig, mu, wq, wk, wv, wo, bq, bk, bv, bo, mask, rz)

    if recover_shape:
        return out_cs.reshape(B, C, H, W)        # free reshape back to NCHW
    # PyTorch's recover_shape=False returns the (B, S, C) sequence with s = w*H + h.
    return jnp.transpose(out_cs.reshape(B, C, H, W), (0, 3, 2, 1)).reshape(B, S, C)


def reference_jax(x, y, params, *, num_heads):
    """Pure-JAX mirror of the PyTorch forward (weights in (out, in) orientation)."""
    B, C, H, W = x.shape
    S = W * H
    head_dim = C // num_heads
    x_1d = jnp.transpose(x, (0, 3, 2, 1)).reshape(B, S, C)
    mean = jnp.mean(x_1d, axis=1, keepdims=True)
    var = jnp.var(x_1d, axis=1, keepdims=True, ddof=1)     # unbiased, like torch.var_mean
    n = (x_1d - mean) * jax.lax.rsqrt(var + 1e-6)
    h = n * params["sigma"][y][:, None, :] + params["mu"][y][:, None, :]
    h = jax.nn.relu(h)
    q = h @ params["wq"].T + params["bq"]
    k = h @ params["wk"].T + params["bk"]
    v = h @ params["wv"].T + params["bv"]
    qh = q.reshape(B, S, num_heads, head_dim)
    kh = k.reshape(B, S, num_heads, head_dim)
    vh = v.reshape(B, S, num_heads, head_dim)
    s = jnp.einsum("bqhd,bkhd->bhqk", qh, kh) / (head_dim ** 0.5)
    p = jax.nn.softmax(s, axis=-1)
    o = jnp.einsum("bhqk,bkhd->bqhd", p, vh).reshape(B, S, C)
    o = o @ params["wo"].T + params["bo"]
    out_1d = o * params["rezero"][0] + x_1d
    return jnp.transpose(out_1d.reshape(B, W, H, C), (0, 3, 2, 1))


if __name__ == "__main__":
    B, C, H, W = 2, 32, 8, 8
    num_heads = 4
    max_styles = 4

    key = jax.random.PRNGKey(0)
    keys = jax.random.split(key, 12)

    # PyTorch inits mu/sigma/rezero to zero which makes the output trivially x;
    # use small random values so the kernel path is actually exercised.
    scale = 1.0 / (C ** 0.5)
    params = {
        "mu":     0.5 * jax.random.normal(keys[0], (max_styles, C), jnp.float32),
        "sigma":  0.5 * jax.random.normal(keys[1], (max_styles, C), jnp.float32),
        # weights in PyTorch (out_features, in_features) orientation
        "wq": scale * jax.random.normal(keys[2], (C, C), jnp.float32),
        "wk": scale * jax.random.normal(keys[3], (C, C), jnp.float32),
        "wv": scale * jax.random.normal(keys[4], (C, C), jnp.float32),
        "wo": scale * jax.random.normal(keys[5], (C, C), jnp.float32),
        "bq": 0.1 * jax.random.normal(keys[6], (C,), jnp.float32),
        "bk": 0.1 * jax.random.normal(keys[7], (C,), jnp.float32),
        "bv": 0.1 * jax.random.normal(keys[8], (C,), jnp.float32),
        "bo": 0.1 * jax.random.normal(keys[9], (C,), jnp.float32),
        "rezero": jnp.array([0.3], jnp.float32),
    }

    x = jax.random.normal(keys[10], (B, C, H, W), jnp.float32)
    y = jax.random.randint(keys[11], (B,), 0, max_styles)

    out = auto_convert_attn_block(x, y, params, num_heads=num_heads)
    out = jax.block_until_ready(out)

    ref = jax.block_until_ready(reference_jax(x, y, params, num_heads=num_heads))

    assert out.shape == (B, C, H, W), out.shape
    err = float(jnp.max(jnp.abs(out - ref)))
    assert jnp.allclose(out, ref, atol=2e-3, rtol=2e-3), err

    print("KERNEL_OK")
</pallas_src>

<mosaic_0001>
module attributes {stable_mosaic.version = 11 : i64} {
  func.func @_attn_block_kernel(%arg0: i32, %arg1: memref<2x32x64xf32, #tpu.memory_space<vmem>>, %arg2: memref<2x32x1xf32, #tpu.memory_space<vmem>>, %arg3: memref<2x32x1xf32, #tpu.memory_space<vmem>>, %arg4: memref<32x32xf32, #tpu.memory_space<vmem>>, %arg5: memref<32x32xf32, #tpu.memory_space<vmem>>, %arg6: memref<32x32xf32, #tpu.memory_space<vmem>>, %arg7: memref<32x32xf32, #tpu.memory_space<vmem>>, %arg8: memref<32x1xf32, #tpu.memory_space<vmem>>, %arg9: memref<32x1xf32, #tpu.memory_space<vmem>>, %arg10: memref<32x1xf32, #tpu.memory_space<vmem>>, %arg11: memref<32x1xf32, #tpu.memory_space<vmem>>, %arg12: memref<32x256xf32, #tpu.memory_space<vmem>>, %arg13: memref<1x1xf32, #tpu.memory_space<vmem>>, %arg14: memref<2x32x64xf32, #tpu.memory_space<vmem>>) attributes {dimension_semantics = [#tpu.dimension_semantics<parallel>], iteration_bounds = array<i64: 1>, scalar_prefetch = 0 : i64, scratch_operands = 0 : i64, tpu.core_type = #tpu.core_type<tc>, window_params = [{transform_indices = @transform_0, window_bounds = array<i64: 2, 32, 64>}, {transform_indices = @transform_1, window_bounds = array<i64: 2, 32, 1>}, {transform_indices = @transform_2, window_bounds = array<i64: 2, 32, 1>}, {pipeline_mode = #tpu.pipeline_mode<synchronous>, transform_indices = @transform_3, window_bounds = array<i64: 32, 32>}, {pipeline_mode = #tpu.pipeline_mode<synchronous>, transform_indices = @transform_4, window_bounds = array<i64: 32, 32>}, {pipeline_mode = #tpu.pipeline_mode<synchronous>, transform_indices = @transform_5, window_bounds = array<i64: 32, 32>}, {pipeline_mode = #tpu.pipeline_mode<synchronous>, transform_indices = @transform_6, window_bounds = array<i64: 32, 32>}, {pipeline_mode = #tpu.pipeline_mode<synchronous>, transform_indices = @transform_7, window_bounds = array<i64: 32, 1>}, {pipeline_mode = #tpu.pipeline_mode<synchronous>, transform_indices = @transform_8, window_bounds = array<i64: 32, 1>}, {pipeline_mode = #tpu.pipeline_mode<synchronous>, transform_indices = @transform_9, window_bounds = array<i64: 32, 1>}, {pipeline_mode = #tpu.pipeline_mode<synchronous>, transform_indices = @transform_10, window_bounds = array<i64: 32, 1>}, {pipeline_mode = #tpu.pipeline_mode<synchronous>, transform_indices = @transform_11, window_bounds = array<i64: 32, 256>}, {pipeline_mode = #tpu.pipeline_mode<synchronous>, transform_indices = @transform_12, window_bounds = array<i64: 1, 1>}, {transform_indices = @transform_13, window_bounds = array<i64: 2, 32, 64>}]} {
    %c0 = arith.constant 0 : index
    %c0_0 = arith.constant 0 : index
    %0 = vector.load %arg4[%c0, %c0_0] : memref<32x32xf32, #tpu.memory_space<vmem>>, vector<32x32xf32>
    %c0_1 = arith.constant 0 : index
    %c0_2 = arith.constant 0 : index
    %1 = vector.load %arg5[%c0_1, %c0_2] : memref<32x32xf32, #tpu.memory_space<vmem>>, vector<32x32xf32>
    %c0_3 = arith.constant 0 : index
    %c0_4 = arith.constant 0 : index
    %2 = vector.load %arg6[%c0_3, %c0_4] : memref<32x32xf32, #tpu.memory_space<vmem>>, vector<32x32xf32>
    %c0_5 = arith.constant 0 : index
    %c0_6 = arith.constant 0 : index
    %3 = vector.load %arg7[%c0_5, %c0_6] : memref<32x32xf32, #tpu.memory_space<vmem>>, vector<32x32xf32>
    %c0_7 = arith.constant 0 : index
    %c0_8 = arith.constant 0 : index
    %4 = vector.load %arg8[%c0_7, %c0_8] : memref<32x1xf32, #tpu.memory_space<vmem>>, vector<32x1xf32>
    %c0_9 = arith.constant 0 : index
    %c0_10 = arith.constant 0 : index
    %5 = vector.load %arg9[%c0_9, %c0_10] : memref<32x1xf32, #tpu.memory_space<vmem>>, vector<32x1xf32>
    %c0_11 = arith.constant 0 : index
    %c0_12 = arith.constant 0 : index
    %6 = vector.load %arg10[%c0_11, %c0_12] : memref<32x1xf32, #tpu.memory_space<vmem>>, vector<32x1xf32>
    %c0_13 = arith.constant 0 : index
    %c0_14 = arith.constant 0 : index
    %7 = vector.load %arg11[%c0_13, %c0_14] : memref<32x1xf32, #tpu.memory_space<vmem>>, vector<32x1xf32>
    %c0_15 = arith.constant 0 : index
    %c0_16 = arith.constant 0 : index
    %8 = vector.load %arg12[%c0_15, %c0_16] : memref<32x256xf32, #tpu.memory_space<vmem>>, vector<32x256xf32>
    %c0_17 = arith.constant 0 : index
    %c0_18 = arith.constant 0 : index
    %9 = vector.load %arg13[%c0_17, %c0_18] : memref<1x1xf32, #tpu.memory_space<vmem>>, vector<1x1xf32>
    %10 = vector.extract %9[0, 0] : f32 from vector<1x1xf32>
    %c0_19 = arith.constant 0 : index
    %c0_20 = arith.constant 0 : index
    %c0_21 = arith.constant 0 : index
    %11 = vector.load %arg1[%c0_19, %c0_20, %c0_21] : memref<2x32x64xf32, #tpu.memory_space<vmem>>, vector<1x32x64xf32>
    %12 = vector.shape_cast %11 : vector<1x32x64xf32> to vector<32x64xf32>
    %cst = arith.constant dense<0.000000e+00> : vector<32xf32>
    %13 = vector.multi_reduction <add>, %12, %cst [1] : vector<32x64xf32> to vector<32xf32>
    %14 = vector.shape_cast %13 : vector<32xf32> to vector<32x1xf32>
    %cst_22 = arith.constant 6.400000e+01 : f32
    %15 = vector.broadcast %cst_22 : f32 to vector<32x1xf32>
    %16 = arith.divf %14, %15 : vector<32x1xf32>
    %17 = vector.broadcast %16 : vector<32x1xf32> to vector<32x64xf32>
    %18 = arith.subf %12, %17 : vector<32x64xf32>
    %19 = arith.mulf %18, %18 : vector<32x64xf32>
    %cst_23 = arith.constant dense<0.000000e+00> : vector<32xf32>
    %20 = vector.multi_reduction <add>, %19, %cst_23 [1] : vector<32x64xf32> to vector<32xf32>
    %21 = vector.shape_cast %20 : vector<32xf32> to vector<32x1xf32>
    %cst_24 = arith.constant 0.0158730168 : f32
    %22 = vector.broadcast %cst_24 : f32 to vector<32x1xf32>
    %23 = arith.mulf %21, %22 : vector<32x1xf32>
    %cst_25 = arith.constant 9.99999997E-7 : f32
    %24 = vector.broadcast %cst_25 : f32 to vector<32x1xf32>
    %25 = arith.addf %23, %24 : vector<32x1xf32>
    %26 = math.rsqrt %25 : vector<32x1xf32>
    %27 = vector.broadcast %26 : vector<32x1xf32> to vector<32x64xf32>
    %28 = arith.mulf %18, %27 : vector<32x64xf32>
    %c0_26 = arith.constant 0 : index
    %c0_27 = arith.constant 0 : index
    %c0_28 = arith.constant 0 : index
    %29 = vector.load %arg2[%c0_26, %c0_27, %c0_28] : memref<2x32x1xf32, #tpu.memory_space<vmem>>, vector<1x32x1xf32>
    %30 = vector.shape_cast %29 : vector<1x32x1xf32> to vector<32x1xf32>
    %31 = vector.broadcast %30 : vector<32x1xf32> to vector<32x64xf32>
    %32 = arith.mulf %28, %31 : vector<32x64xf32>
    %c0_29 = arith.constant 0 : index
    %c0_30 = arith.constant 0 : index
    %c0_31 = arith.constant 0 : index
    %33 = vector.load %arg3[%c0_29, %c0_30, %c0_31] : memref<2x32x1xf32, #tpu.memory_space<vmem>>, vector<1x32x1xf32>
    %34 = vector.shape_cast %33 : vector<1x32x1xf32> to vector<32x1xf32>
    %35 = vector.broadcast %34 : vector<32x1xf32> to vector<32x64xf32>
    %36 = arith.addf %32, %35 : vector<32x64xf32>
    %cst_32 = arith.constant 0.000000e+00 : f32
    %37 = vector.broadcast %cst_32 : f32 to vector<32x64xf32>
    %38 = arith.maximumf %36, %37 : vector<32x64xf32>
    %cst_33 = arith.constant dense<0.000000e+00> : vector<32x64xf32>
    %39 = tpu.matmul %0, %38, %cst_33 {dimension_numbers = #tpu.dot_dimension_numbers<[1], [0], [0], [1], [0, 0, 1, 1], [], []>} : vector<32x32xf32>, vector<32x64xf32>, vector<32x64xf32> -> vector<32x64xf32>
    %40 = vector.broadcast %4 : vector<32x1xf32> to vector<32x64xf32>
    %41 = arith.addf %39, %40 : vector<32x64xf32>
    %cst_34 = arith.constant 0.353553385 : f32
    %42 = vector.broadcast %cst_34 : f32 to vector<32x64xf32>
    %43 = arith.mulf %41, %42 : vector<32x64xf32>
    %cst_35 = arith.constant dense<0.000000e+00> : vector<32x64xf32>
    %44 = tpu.matmul %1, %38, %cst_35 {dimension_numbers = #tpu.dot_dimension_numbers<[1], [0], [0], [1], [0, 0, 1, 1], [], []>} : vector<32x32xf32>, vector<32x64xf32>, vector<32x64xf32> -> vector<32x64xf32>
    %45 = vector.broadcast %5 : vector<32x1xf32> to vector<32x64xf32>
    %46 = arith.addf %44, %45 : vector<32x64xf32>
    %cst_36 = arith.constant dense<0.000000e+00> : vector<32x64xf32>
    %47 = tpu.matmul %2, %38, %cst_36 {dimension_numbers = #tpu.dot_dimension_numbers<[1], [0], [0], [1], [0, 0, 1, 1], [], []>} : vector<32x32xf32>, vector<32x64xf32>, vector<32x64xf32> -> vector<32x64xf32>
    %48 = vector.broadcast %6 : vector<32x1xf32> to vector<32x64xf32>
    %49 = arith.addf %47, %48 : vector<32x64xf32>
    %50 = tpu.concatenate %46, %46, %46, %46 in 1 : vector<32x64xf32>, vector<32x64xf32>, vector<32x64xf32>, vector<32x64xf32> -> vector<32x256xf32>
    %51 = arith.mulf %50, %8 : vector<32x256xf32>
    %52 = tpu.concatenate %49, %49, %49, %49 in 1 : vector<32x64xf32>, vector<32x64xf32>, vector<32x64xf32>, vector<32x64xf32> -> vector<32x256xf32>
    %53 = arith.mulf %52, %8 : vector<32x256xf32>
    %54 = tpu.transpose %43, [1, 0] : vector<32x64xf32> -> vector<64x32xf32>
    %cst_37 = arith.constant dense<0.000000e+00> : vector<64x256xf32>
    %55 = tpu.matmul %54, %51, %cst_37 {dimension_numbers = #tpu.dot_dimension_numbers<[1], [0], [0], [1], [0, 0, 1, 1], [], []>} : vector<64x32xf32>, vector<32x256xf32>, vector<64x256xf32> -> vector<64x256xf32>
    %cst_38 = arith.constant dense<0xFF800000> : vector<64xf32>
    %56 = vector.multi_reduction <maximumf>, %55, %cst_38 [1] : vector<64x256xf32> to vector<64xf32>
    %57 = vector.shape_cast %56 : vector<64xf32> to vector<64x1xf32>
    %58 = vector.broadcast %57 : vector<64x1xf32> to vector<64x256xf32>
    %59 = arith.subf %55, %58 : vector<64x256xf32>
    %60 = math.exp %59 : vector<64x256xf32>
    %cst_39 = arith.constant dense<0.000000e+00> : vector<32x64xf32>
    %61 = tpu.matmul %53, %60, %cst_39 {dimension_numbers = #tpu.dot_dimension_numbers<[1], [1], [0], [0], [0, 0, 1, 0], [], []>} : vector<32x256xf32>, vector<64x256xf32>, vector<32x64xf32> -> vector<32x64xf32>
    %cst_40 = arith.constant dense<0.000000e+00> : vector<32x64xf32>
    %62 = tpu.matmul %8, %60, %cst_40 {dimension_numbers = #tpu.dot_dimension_numbers<[1], [1], [0], [0], [0, 0, 1, 0], [], []>} : vector<32x256xf32>, vector<64x256xf32>, vector<32x64xf32> -> vector<32x64xf32>
    %63 = tpu.reciprocal %62 {approx = true} : vector<32x64xf32> -> vector<32x64xf32>
    %64 = arith.mulf %61, %63 : vector<32x64xf32>
    %cst_41 = arith.constant dense<0.000000e+00> : vector<32x64xf32>
    %65 = tpu.matmul %3, %64, %cst_41 {dimension_numbers = #tpu.dot_dimension_numbers<[1], [0], [0], [1], [0, 0, 1, 1], [], []>} : vector<32x32xf32>, vector<32x64xf32>, vector<32x64xf32> -> vector<32x64xf32>
    %66 = vector.broadcast %7 : vector<32x1xf32> to vector<32x64xf32>
    %67 = arith.addf %65, %66 : vector<32x64xf32>
    %68 = vector.broadcast %10 : f32 to vector<32x64xf32>
    %69 = arith.mulf %67, %68 : vector<32x64xf32>
    %70 = arith.addf %69, %12 : vector<32x64xf32>
    %c0_42 = arith.constant 0 : index
    %c0_43 = arith.constant 0 : index
    %c0_44 = arith.constant 0 : index
    %71 = vector.load %arg14[%c0_42, %c0_43, %c0_44] : memref<2x32x64xf32, #tpu.memory_space<vmem>>, vector<1x32x64xf32>
    %72 = vector.shape_cast %71 : vector<1x32x64xf32> to vector<32x64xf32>
    %73 = vector.shape_cast %70 : vector<32x64xf32> to vector<1x32x64xf32>
    tpu.vector_store %arg14[%c0_42, %c0_43, %c0_44], %73 {strides = array<i32>} : memref<2x32x64xf32, #tpu.memory_space<vmem>>, vector<1x32x64xf32>,
    %c1 = arith.constant 1 : index
    %c0_45 = arith.constant 0 : index
    %c0_46 = arith.constant 0 : index
    %74 = vector.load %arg1[%c1, %c0_45, %c0_46] : memref<2x32x64xf32, #tpu.memory_space<vmem>>, vector<1x32x64xf32>
    %75 = vector.shape_cast %74 : vector<1x32x64xf32> to vector<32x64xf32>
    %cst_47 = arith.constant dense<0.000000e+00> : vector<32xf32>
    %76 = vector.multi_reduction <add>, %75, %cst_47 [1] : vector<32x64xf32> to vector<32xf32>
    %77 = vector.shape_cast %76 : vector<32xf32> to vector<32x1xf32>
    %cst_48 = arith.constant 6.400000e+01 : f32
    %78 = vector.broadcast %cst_48 : f32 to vector<32x1xf32>
    %79 = arith.divf %77, %78 : vector<32x1xf32>
    %80 = vector.broadcast %79 : vector<32x1xf32> to vector<32x64xf32>
    %81 = arith.subf %75, %80 : vector<32x64xf32>
    %82 = arith.mulf %81, %81 : vector<32x64xf32>
    %cst_49 = arith.constant dense<0.000000e+00> : vector<32xf32>
    %83 = vector.multi_reduction <add>, %82, %cst_49 [1] : vector<32x64xf32> to vector<32xf32>
    %84 = vector.shape_cast %83 : vector<32xf32> to vector<32x1xf32>
    %cst_50 = arith.constant 0.0158730168 : f32
    %85 = vector.broadcast %cst_50 : f32 to vector<32x1xf32>
    %86 = arith.mulf %84, %85 : vector<32x1xf32>
    %cst_51 = arith.constant 9.99999997E-7 : f32
    %87 = vector.broadcast %cst_51 : f32 to vector<32x1xf32>
    %88 = arith.addf %86, %87 : vector<32x1xf32>
    %89 = math.rsqrt %88 : vector<32x1xf32>
    %90 = vector.broadcast %89 : vector<32x1xf32> to vector<32x64xf32>
    %91 = arith.mulf %81, %90 : vector<32x64xf32>
    %c1_52 = arith.constant 1 : index
    %c0_53 = arith.constant 0 : index
    %c0_54 = arith.constant 0 : index
    %92 = vector.load %arg2[%c1_52, %c0_53, %c0_54] : memref<2x32x1xf32, #tpu.memory_space<vmem>>, vector<1x32x1xf32>
    %93 = vector.shape_cast %92 : vector<1x32x1xf32> to vector<32x1xf32>
    %94 = vector.broadcast %93 : vector<32x1xf32> to vector<32x64xf32>
    %95 = arith.mulf %91, %94 : vector<32x64xf32>
    %c1_55 = arith.constant 1 : index
    %c0_56 = arith.constant 0 : index
    %c0_57 = arith.constant 0 : index
    %96 = vector.load %arg3[%c1_55, %c0_56, %c0_57] : memref<2x32x1xf32, #tpu.memory_space<vmem>>, vector<1x32x1xf32>
    %97 = vector.shape_cast %96 : vector<1x32x1xf32> to vector<32x1xf32>
    %98 = vector.broadcast %97 : vector<32x1xf32> to vector<32x64xf32>
    %99 = arith.addf %95, %98 : vector<32x64xf32>
    %cst_58 = arith.constant 0.000000e+00 : f32
    %100 = vector.broadcast %cst_58 : f32 to vector<32x64xf32>
    %101 = arith.maximumf %99, %100 : vector<32x64xf32>
    %cst_59 = arith.constant dense<0.000000e+00> : vector<32x64xf32>
    %102 = tpu.matmul %0, %101, %cst_59 {dimension_numbers = #tpu.dot_dimension_numbers<[1], [0], [0], [1], [0, 0, 1, 1], [], []>} : vector<32x32xf32>, vector<32x64xf32>, vector<32x64xf32> -> vector<32x64xf32>
    %103 = vector.broadcast %4 : vector<32x1xf32> to vector<32x64xf32>
    %104 = arith.addf %102, %103 : vector<32x64xf32>
    %cst_60 = arith.constant 0.353553385 : f32
    %105 = vector.broadcast %cst_60 : f32 to vector<32x64xf32>
    %106 = arith.mulf %104, %105 : vector<32x64xf32>
    %cst_61 = arith.constant dense<0.000000e+00> : vector<32x64xf32>
    %107 = tpu.matmul %1, %101, %cst_61 {dimension_numbers = #tpu.dot_dimension_numbers<[1], [0], [0], [1], [0, 0, 1, 1], [], []>} : vector<32x32xf32>, vector<32x64xf32>, vector<32x64xf32> -> vector<32x64xf32>
    %108 = vector.broadcast %5 : vector<32x1xf32> to vector<32x64xf32>
    %109 = arith.addf %107, %108 : vector<32x64xf32>
    %cst_62 = arith.constant dense<0.000000e+00> : vector<32x64xf32>
    %110 = tpu.matmul %2, %101, %cst_62 {dimension_numbers = #tpu.dot_dimension_numbers<[1], [0], [0], [1], [0, 0, 1, 1], [], []>} : vector<32x32xf32>, vector<32x64xf32>, vector<32x64xf32> -> vector<32x64xf32>
    %111 = vector.broadcast %6 : vector<32x1xf32> to vector<32x64xf32>
    %112 = arith.addf %110, %111 : vector<32x64xf32>
    %113 = tpu.concatenate %109, %109, %109, %109 in 1 : vector<32x64xf32>, vector<32x64xf32>, vector<32x64xf32>, vector<32x64xf32> -> vector<32x256xf32>
    %114 = arith.mulf %113, %8 : vector<32x256xf32>
    %115 = tpu.concatenate %112, %112, %112, %112 in 1 : vector<32x64xf32>, vector<32x64xf32>, vector<32x64xf32>, vector<32x64xf32> -> vector<32x256xf32>
    %116 = arith.mulf %115, %8 : vector<32x256xf32>
    %117 = tpu.transpose %106, [1, 0] : vector<32x64xf32> -> vector<64x32xf32>
    %cst_63 = arith.constant dense<0.000000e+00> : vector<64x256xf32>
    %118 = tpu.matmul %117, %114, %cst_63 {dimension_numbers = #tpu.dot_dimension_numbers<[1], [0], [0], [1], [0, 0, 1, 1], [], []>} : vector<64x32xf32>, vector<32x256xf32>, vector<64x256xf32> -> vector<64x256xf32>
    %cst_64 = arith.constant dense<0xFF800000> : vector<64xf32>
    %119 = vector.multi_reduction <maximumf>, %118, %cst_64 [1] : vector<64x256xf32> to vector<64xf32>
    %120 = vector.shape_cast %119 : vector<64xf32> to vector<64x1xf32>
    %121 = vector.broadcast %120 : vector<64x1xf32> to vector<64x256xf32>
    %122 = arith.subf %118, %121 : vector<64x256xf32>
    %123 = math.exp %122 : vector<64x256xf32>
    %cst_65 = arith.constant dense<0.000000e+00> : vector<32x64xf32>
    %124 = tpu.matmul %116, %123, %cst_65 {dimension_numbers = #tpu.dot_dimension_numbers<[1], [1], [0], [0], [0, 0, 1, 0], [], []>} : vector<32x256xf32>, vector<64x256xf32>, vector<32x64xf32> -> vector<32x64xf32>
    %cst_66 = arith.constant dense<0.000000e+00> : vector<32x64xf32>
    %125 = tpu.matmul %8, %123, %cst_66 {dimension_numbers = #tpu.dot_dimension_numbers<[1], [1], [0], [0], [0, 0, 1, 0], [], []>} : vector<32x256xf32>, vector<64x256xf32>, vector<32x64xf32> -> vector<32x64xf32>
    %126 = tpu.reciprocal %125 {approx = true} : vector<32x64xf32> -> vector<32x64xf32>
    %127 = arith.mulf %124, %126 : vector<32x64xf32>
    %cst_67 = arith.constant dense<0.000000e+00> : vector<32x64xf32>
    %128 = tpu.matmul %3, %127, %cst_67 {dimension_numbers = #tpu.dot_dimension_numbers<[1], [0], [0], [1], [0, 0, 1, 1], [], []>} : vector<32x32xf32>, vector<32x64xf32>, vector<32x64xf32> -> vector<32x64xf32>
    %129 = vector.broadcast %7 : vector<32x1xf32> to vector<32x64xf32>
    %130 = arith.addf %128, %129 : vector<32x64xf32>
    %131 = vector.broadcast %10 : f32 to vector<32x64xf32>
    %132 = arith.mulf %130, %131 : vector<32x64xf32>
    %133 = arith.addf %132, %75 : vector<32x64xf32>
    %c1_68 = arith.constant 1 : index
    %c0_69 = arith.constant 0 : index
    %c0_70 = arith.constant 0 : index
    %134 = vector.load %arg14[%c1_68, %c0_69, %c0_70] : memref<2x32x64xf32, #tpu.memory_space<vmem>>, vector<1x32x64xf32>
    %135 = vector.shape_cast %134 : vector<1x32x64xf32> to vector<32x64xf32>
    %136 = vector.shape_cast %133 : vector<32x64xf32> to vector<1x32x64xf32>
    tpu.vector_store %arg14[%c1_68, %c0_69, %c0_70], %136 {strides = array<i32>} : memref<2x32x64xf32, #tpu.memory_space<vmem>>, vector<1x32x64xf32>,
    return
  }
  func.func @transform_0(%arg0: i32) -> (i32, i32, i32) {
    %c0_i32 = arith.constant 0 : i32
    %c0_i32_0 = arith.constant 0 : i32
    %c0_i32_1 = arith.constant 0 : i32
    return %arg0, %c0_i32, %c0_i32_0 : i32, i32, i32
  }
  func.func @transform_1(%arg0: i32) -> (i32, i32, i32) {
    %c0_i32 = arith.constant 0 : i32
    %c0_i32_0 = arith.constant 0 : i32
    %c0_i32_1 = arith.constant 0 : i32
    return %arg0, %c0_i32, %c0_i32_0 : i32, i32, i32
  }
  func.func @transform_2(%arg0: i32) -> (i32, i32, i32) {
    %c0_i32 = arith.constant 0 : i32
    %c0_i32_0 = arith.constant 0 : i32
    %c0_i32_1 = arith.constant 0 : i32
    return %arg0, %c0_i32, %c0_i32_0 : i32, i32, i32
  }
  func.func @transform_3(%arg0: i32) -> (i32, i32) {
    %c0_i32 = arith.constant 0 : i32
    %c0_i32_0 = arith.constant 0 : i32
    %c0_i32_1 = arith.constant 0 : i32
    return %c0_i32, %c0_i32_0 : i32, i32
  }
  func.func @transform_4(%arg0: i32) -> (i32, i32) {
    %c0_i32 = arith.constant 0 : i32
    %c0_i32_0 = arith.constant 0 : i32
    %c0_i32_1 = arith.constant 0 : i32
    return %c0_i32, %c0_i32_0 : i32, i32
  }
  func.func @transform_5(%arg0: i32) -> (i32, i32) {
    %c0_i32 = arith.constant 0 : i32
    %c0_i32_0 = arith.constant 0 : i32
    %c0_i32_1 = arith.constant 0 : i32
    return %c0_i32, %c0_i32_0 : i32, i32
  }
  func.func @transform_6(%arg0: i32) -> (i32, i32) {
    %c0_i32 = arith.constant 0 : i32
    %c0_i32_0 = arith.constant 0 : i32
    %c0_i32_1 = arith.constant 0 : i32
    return %c0_i32, %c0_i32_0 : i32, i32
  }
  func.func @transform_7(%arg0: i32) -> (i32, i32) {
    %c0_i32 = arith.constant 0 : i32
    %c0_i32_0 = arith.constant 0 : i32
    %c0_i32_1 = arith.constant 0 : i32
    return %c0_i32, %c0_i32_0 : i32, i32
  }
  func.func @transform_8(%arg0: i32) -> (i32, i32) {
    %c0_i32 = arith.constant 0 : i32
    %c0_i32_0 = arith.constant 0 : i32
    %c0_i32_1 = arith.constant 0 : i32
    return %c0_i32, %c0_i32_0 : i32, i32
  }
  func.func @transform_9(%arg0: i32) -> (i32, i32) {
    %c0_i32 = arith.constant 0 : i32
    %c0_i32_0 = arith.constant 0 : i32
    %c0_i32_1 = arith.constant 0 : i32
    return %c0_i32, %c0_i32_0 : i32, i32
  }
  func.func @transform_10(%arg0: i32) -> (i32, i32) {
    %c0_i32 = arith.constant 0 : i32
    %c0_i32_0 = arith.constant 0 : i32
    %c0_i32_1 = arith.constant 0 : i32
    return %c0_i32, %c0_i32_0 : i32, i32
  }
  func.func @transform_11(%arg0: i32) -> (i32, i32) {
    %c0_i32 = arith.constant 0 : i32
    %c0_i32_0 = arith.constant 0 : i32
    %c0_i32_1 = arith.constant 0 : i32
    return %c0_i32, %c0_i32_0 : i32, i32
  }
  func.func @transform_12(%arg0: i32) -> (i32, i32) {
    %c0_i32 = arith.constant 0 : i32
    %c0_i32_0 = arith.constant 0 : i32
    %c0_i32_1 = arith.constant 0 : i32
    return %c0_i32, %c0_i32_0 : i32, i32
  }
  func.func @transform_13(%arg0: i32) -> (i32, i32, i32) {
    %c0_i32 = arith.constant 0 : i32
    %c0_i32_0 = arith.constant 0 : i32
    %c0_i32_1 = arith.constant 0 : i32
    return %arg0, %c0_i32, %c0_i32_0 : i32, i32, i32
  }
}

</mosaic_0001>

<llo_original>
// kernel: tpu_custom_call.1
$region0: #{tpu_custom_call.1}
  #allocation0 [shape = 'u32[]', space=smem, size = 0x4, offset = 0x4, fixed_abs, tag = 'smem constant byte address 0x4 - core index']
  #allocation1 [shape = 'u32[144,128]{1,0:T(1,128)}', space=vmem, size = 0x12000, scoped, tag = 'internal scratch']
  #allocation2 [shape = 'f32[1,1]{1,0:T(1,128)S(1)}', space=vmem, size = 0x200, scoped, tag = 'scoped memory for tpu_custom_call.1']
  %s0 = inlined_call_operand.vmem [shape: f32[2,32,64], index: 0, kind: input, shape index: {}]
  %s1 = inlined_call_operand.vmem [shape: f32[2,32,1], index: 1, kind: input, shape index: {}]
  %s2 = inlined_call_operand.vmem [shape: f32[2,32,1], index: 2, kind: input, shape index: {}]
  %s3 = inlined_call_operand.vmem [shape: f32[32,32], index: 3, kind: input, shape index: {}]
  %s4 = inlined_call_operand.vmem [shape: f32[32,32], index: 4, kind: input, shape index: {}]
  %s5 = inlined_call_operand.vmem [shape: f32[32,32], index: 5, kind: input, shape index: {}]
  %s6 = inlined_call_operand.vmem [shape: f32[32,32], index: 6, kind: input, shape index: {}]
  %s7 = inlined_call_operand.vmem [shape: f32[32,1], index: 7, kind: input, shape index: {}]
  %s8 = inlined_call_operand.vmem [shape: f32[32,1], index: 8, kind: input, shape index: {}]
  %s9 = inlined_call_operand.vmem [shape: f32[32,1], index: 9, kind: input, shape index: {}]
  %s10 = inlined_call_operand.vmem [shape: f32[32,1], index: 10, kind: input, shape index: {}]
  %s11 = inlined_call_operand.vmem [shape: f32[32,256], index: 11, kind: input, shape index: {}]
  %s12 = inlined_call_operand.<no memory space> [shape: f32[1,1], index: 12, kind: input, shape index: {}]
  %s13 = inlined_call_operand.hbm [shape: f32[2,32,64], index: 13, kind: output, shape index: {}]
  %s14 = sld [smem:[#allocation0]]
  $region62: #{tpu_custom_call.1} parent=0
    _
  %s16 = ssub.s32 1, %s14
  %s17 = scalar_select 0, %s16, %s14
  %v18 = vstv %s12
  %19 = vst [vmem:[#allocation2] sm:$0x1] %v18
  $region1: #{tpu_custom_call.1} parent=0
    #allocation3 [shape = 'u8[32768]{0}', space=vmem, size = 0x8000, scoped, tag = 'output window, operand 0, single buffered']
    #allocation4 [shape = 's32[1]{0}', space=sflag, size = 0x4, scoped, tag = 'scoped memory for tpu_custom_call.1']
    %20 = vsyncpa [#allocation4], 0
    // Predicated region
    $region2: #{tpu_custom_call.1} parent=1 // pred_check
      _
    $region3: #{tpu_custom_call.1} parent=1 // pred_check_branch
      %22 = sbr.rel (0) target = $region5
    $region4: #{tpu_custom_call.1} parent=1 // pred_region
      _
    $region5: #{tpu_custom_call.1} parent=1 // pred_fallthru
      _
    // Predicated region
    $region6: #{tpu_custom_call.1} parent=1 // pred_check
      _
    $region7: #{tpu_custom_call.1} parent=1 // pred_check_branch
      %24 = sbr.rel (0) target = $region9
    $region8: #{tpu_custom_call.1} parent=1 // pred_region
      _
    $region9: #{tpu_custom_call.1} parent=1 // pred_fallthru
      _
    // Predicated region
    $region10: #{tpu_custom_call.1} parent=1 // pred_check
      _
    $region11: #{tpu_custom_call.1} parent=1 // pred_check_branch
      %26 = sbr.rel (0) target = $region13
    $region12: #{tpu_custom_call.1} parent=1 // pred_region
      _
    $region13: #{tpu_custom_call.1} parent=1 // pred_fallthru
      _
    // Predicated region
    $region14: #{tpu_custom_call.1} parent=1 // pred_check
      _
    $region15: #{tpu_custom_call.1} parent=1 // pred_check_branch
      %28 = sbr.rel (0) target = $region17
    $region16: #{tpu_custom_call.1} parent=1 // pred_region
      _
    $region17: #{tpu_custom_call.1} parent=1 // pred_fallthru
      _
    // Predicated region
    $region18: #{tpu_custom_call.1} parent=1 // pred_check
      _
    $region19: #{tpu_custom_call.1} parent=1 // pred_check_branch
      %30 = sbr.rel (0) target = $region21
    $region20: #{tpu_custom_call.1} parent=1 // pred_region
      _
    $region21: #{tpu_custom_call.1} parent=1 // pred_fallthru
      _
    // Predicated region
    $region22: #{tpu_custom_call.1} parent=1 // pred_check
      _
    $region23: #{tpu_custom_call.1} parent=1 // pred_check_branch
      %32 = sbr.rel (0) target = $region25
    $region24: #{tpu_custom_call.1} parent=1 // pred_region
      _
    $region25: #{tpu_custom_call.1} parent=1 // pred_fallthru
      _
    // Predicated region
    $region26: #{tpu_custom_call.1} parent=1 // pred_check
      _
    $region27: #{tpu_custom_call.1} parent=1 // pred_check_branch
      %34 = sbr.rel (0) target = $region29
    $region28: #{tpu_custom_call.1} parent=1 // pred_region
      _
    $region29: #{tpu_custom_call.1} parent=1 // pred_fallthru
      _
    // Predicated region
    $region30: #{tpu_custom_call.1} parent=1 // pred_check
      _
    $region31: #{tpu_custom_call.1} parent=1 // pred_check_branch
      %36 = sbr.rel (0) target = $region33
    $region32: #{tpu_custom_call.1} parent=1 // pred_region
      _
    $region33: #{tpu_custom_call.1} parent=1 // pred_fallthru
      _
    // Predicated region
    $region34: #{tpu_custom_call.1} parent=1 // pred_check
      _
    $region35: #{tpu_custom_call.1} parent=1 // pred_check_branch
      %38 = sbr.rel (0) target = $region37
    $region36: #{tpu_custom_call.1} parent=1 // pred_region
      _
    $region37: #{tpu_custom_call.1} parent=1 // pred_fallthru
      _
    // Predicated region
    $region38: #{tpu_custom_call.1} parent=1 // pred_check
      _
    $region39: #{tpu_custom_call.1} parent=1 // pred_check_branch
      %40 = sbr.rel (0) target = $region41
    $region40: #{tpu_custom_call.1} parent=1 // pred_region
      _
    $region41: #{tpu_custom_call.1} parent=1 // pred_fallthru
      _
    // Predicated region
    $region42: #{tpu_custom_call.1} parent=1 // pred_check
      _
    $region43: #{tpu_custom_call.1} parent=1 // pred_check_branch
      %42 = sbr.rel (0) target = $region45
    $region44: #{tpu_custom_call.1} parent=1 // pred_region
      _
    $region45: #{tpu_custom_call.1} parent=1 // pred_fallthru
      _
    // Predicated region
    $region46: #{tpu_custom_call.1} parent=1 // pred_check
      _
    $region47: #{tpu_custom_call.1} parent=1 // pred_check_branch
      %44 = sbr.rel (0) target = $region49
    $region48: #{tpu_custom_call.1} parent=1 // pred_region
      _
    $region49: #{tpu_custom_call.1} parent=1 // pred_fallthru
      _
    // Predicated region
    $region50: #{tpu_custom_call.1} parent=1 // pred_check
      _
    $region51: #{tpu_custom_call.1} parent=1 // pred_check_branch
      %46 = sbr.rel (0) target = $region53
    $region52: #{tpu_custom_call.1} parent=1 // pred_region
      _
    $region53: #{tpu_custom_call.1} parent=1 // pred_fallthru
      _
    %v47 = vld [vmem:[%s3] sm:$0xff]
    %v48 = vld [vmem:[%s3 + $0x8] sm:$0xff]
    %v49 = vld [vmem:[%s3 + $0x10] sm:$0xff]
    %v50 = vld [vmem:[%s3 + $0x18] sm:$0xff]
    %v51 = vld [vmem:[%s4] sm:$0xff]
    %v52 = vld [vmem:[%s4 + $0x8] sm:$0xff]
    %v53 = vld [vmem:[%s4 + $0x10] sm:$0xff]
    %v54 = vld [vmem:[%s4 + $0x18] sm:$0xff]
    %v55 = vld [vmem:[%s5] sm:$0xff]
    %v56 = vld [vmem:[%s5 + $0x8] sm:$0xff]
    %v57 = vld [vmem:[%s5 + $0x10] sm:$0xff]
    %v58 = vld [vmem:[%s5 + $0x18] sm:$0xff]
    %v59 = vld [vmem:[%s6] sm:$0xff]
    %v60 = vld [vmem:[%s6 + $0x8] sm:$0xff]
    %v61 = vld [vmem:[%s6 + $0x10] sm:$0xff]
    %v62 = vld [vmem:[%s6 + $0x18] sm:$0xff]
    %v63 = vld [vmem:[%s7] sm:$0xff]
    %v64 = vld [vmem:[%s7 + $0x8] sm:$0xff]
    %v65 = vld [vmem:[%s7 + $0x10] sm:$0xff]
    %v66 = vld [vmem:[%s7 + $0x18] sm:$0xff]
    %v67 = vld [vmem:[%s8] sm:$0xff]
    %v68 = vld [vmem:[%s8 + $0x8] sm:$0xff]
    %v69 = vld [vmem:[%s8 + $0x10] sm:$0xff]
    %v70 = vld [vmem:[%s8 + $0x18] sm:$0xff]
    %v71 = vld [vmem:[%s9] sm:$0xff]
    %v72 = vld [vmem:[%s9 + $0x8] sm:$0xff]
    %v73 = vld [vmem:[%s9 + $0x10] sm:$0xff]
    %v74 = vld [vmem:[%s9 + $0x18] sm:$0xff]
    %v75 = vld [vmem:[%s10] sm:$0xff]
    %v76 = vld [vmem:[%s10 + $0x8] sm:$0xff]
    %v77 = vld [vmem:[%s10 + $0x10] sm:$0xff]
    %v78 = vld [vmem:[%s10 + $0x18] sm:$0xff]
    %v79 = vld [vmem:[%s11] sm:$0xff]
    %v80 = vld [vmem:[%s11 + $0x8] sm:$0xff]
    %v81 = vld [vmem:[%s11 + $0x10] sm:$0xff]
    %v82 = vld [vmem:[%s11 + $0x18] sm:$0xff]
    %v83 = vld [vmem:[%s11 + $0x20] sm:$0xff]
    %v84 = vld [vmem:[%s11 + $0x28] sm:$0xff]
    %v85 = vld [vmem:[%s11 + $0x30] sm:$0xff]
    %v86 = vld [vmem:[%s11 + $0x38] sm:$0xff]
    %v87 = vld [vmem:[#allocation2] sm:$0x1]
    %s88 = vtos %v87
    %v89 = vld [vmem:[%s0] sm:$0xff]
    %v90 = vld [vmem:[%s0 + $0x8] sm:$0xff]
    %v91 = vld [vmem:[%s0 + $0x10] sm:$0xff]
    %v92 = vld [vmem:[%s0 + $0x18] sm:$0xff]
    %vm93 = vcmask 523264
    %v94 = vsel %vm93, %v89, 0.0
    %95 = vadd.xlane.f32.xlu0 %v94
    %v96 = vpop.xlane.xlu0 %95
    %v97 = vsel %vm93, %v90, 0.0
    %98 = vadd.xlane.f32.xlu0 %v97
    %v99 = vpop.xlane.xlu0 %98
    %v100 = vsel %vm93, %v91, 0.0
    %101 = vadd.xlane.f32.xlu0 %v100
    %v102 = vpop.xlane.xlu0 %101
    %v103 = vsel %vm93, %v92, 0.0
    %104 = vadd.xlane.f32.xlu0 %v103
    %v105 = vpop.xlane.xlu0 %104
    %v106 = vrcp.pop 64.0
    %v107 = vmul.f32 %v96, %v106
    %v108 = vmul.f32 %v99, %v106
    %v109 = vmul.f32 %v102, %v106
    %v110 = vmul.f32 %v105, %v106
    %v111 = vsub.f32 %v89, %v107
    %v112 = vsub.f32 %v90, %v108
    %v113 = vsub.f32 %v91, %v109
    %v114 = vsub.f32 %v92, %v110
    %v115 = vmul.f32 %v111, %v111
    %v116 = vmul.f32 %v112, %v112
    %v117 = vmul.f32 %v113, %v113
    %v118 = vmul.f32 %v114, %v114
    %v119 = vsel %vm93, %v115, 0.0
    %120 = vadd.xlane.f32.xlu0 %v119
    %v121 = vpop.xlane.xlu0 %120
    %v122 = vsel %vm93, %v116, 0.0
    %123 = vadd.xlane.f32.xlu0 %v122
    %v124 = vpop.xlane.xlu0 %123
    %v125 = vsel %vm93, %v117, 0.0
    %126 = vadd.xlane.f32.xlu0 %v125
    %v127 = vpop.xlane.xlu0 %126
    %v128 = vsel %vm93, %v118, 0.0
    %129 = vadd.xlane.f32.xlu0 %v128
    %v130 = vpop.xlane.xlu0 %129
    %v131 = vmul.f32 %v121, 0.015873017
    %v132 = vmul.f32 %v124, 0.015873017
    %v133 = vmul.f32 %v127, 0.015873017
    %v134 = vmul.f32 %v130, 0.015873017
    %v135 = vadd.f32 %v131, 1e-06
    %v136 = vadd.f32 %v132, 1e-06
    %v137 = vadd.f32 %v133, 1e-06
    %v138 = vadd.f32 %v134, 1e-06
    %v139 = vrsqrt.pop %v135
    %v140 = vrsqrt.pop %v136
    %v141 = vrsqrt.pop %v137
    %v142 = vrsqrt.pop %v138
    %v143 = vmul.f32 %v111, %v139
    %v144 = vmul.f32 %v112, %v140
    %v145 = vmul.f32 %v113, %v141
    %v146 = vmul.f32 %v114, %v142
    %v147 = vld [vmem:[%s1] sm:$0xff]
    %v148 = vld [vmem:[%s1 + $0x8] sm:$0xff]
    %v149 = vld [vmem:[%s1 + $0x10] sm:$0xff]
    %v150 = vld [vmem:[%s1 + $0x18] sm:$0xff]
    %152 = vset.pattern.permute.xlu0 0
    %153 = vperm.xlu0 %152, %v147
    %v154 = vpop.permute.xlu0 %153
    %157 = vset.pattern.permute.xlu0 0
    %158 = vperm.xlu0 %157, %v148
    %v159 = vpop.permute.xlu0 %158
    %162 = vset.pattern.permute.xlu0 0
    %163 = vperm.xlu0 %162, %v149
    %v164 = vpop.permute.xlu0 %163
    %167 = vset.pattern.permute.xlu0 0
    %168 = vperm.xlu0 %167, %v150
    %v169 = vpop.permute.xlu0 %168
    %v171 = vmul.f32 %v143, %v154
    %v172 = vmul.f32 %v144, %v159
    %v173 = vmul.f32 %v145, %v164
    %v174 = vmul.f32 %v146, %v169
    %v175 = vld [vmem:[%s2] sm:$0xff]
    %v176 = vld [vmem:[%s2 + $0x8] sm:$0xff]
    %v177 = vld [vmem:[%s2 + $0x10] sm:$0xff]
    %v178 = vld [vmem:[%s2 + $0x18] sm:$0xff]
    %180 = vset.pattern.permute.xlu0 0
    %181 = vperm.xlu0 %180, %v175
    %v182 = vpop.permute.xlu0 %181
    %185 = vset.pattern.permute.xlu0 0
    %186 = vperm.xlu0 %185, %v176
    %v187 = vpop.permute.xlu0 %186
    %190 = vset.pattern.permute.xlu0 0
    %191 = vperm.xlu0 %190, %v177
    %v192 = vpop.permute.xlu0 %191
    %195 = vset.pattern.permute.xlu0 0
    %196 = vperm.xlu0 %195, %v178
    %v197 = vpop.permute.xlu0 %196
    %v199 = vadd.f32 %v171, %v182
    %v200 = vadd.f32 %v172, %v187
    %v201 = vadd.f32 %v173, %v192
    %v202 = vadd.f32 %v174, %v197
    %v203 = vmax.f32 %v199, 0.0
    %v204 = vmax.f32 %v200, 0.0
    %v205 = vmax.f32 %v201, 0.0
    %v206 = vmax.f32 %v202, 0.0
    %208 = vset.pattern.permute.xlu0 0
    %209 = vperm.xlu0 %208, %v63
    %v210 = vpop.permute.xlu0 %209
    %213 = vset.pattern.permute.xlu0 0
    %214 = vperm.xlu0 %213, %v64
    %v215 = vpop.permute.xlu0 %214
    %218 = vset.pattern.permute.xlu0 0
    %219 = vperm.xlu0 %218, %v65
    %v220 = vpop.permute.xlu0 %219
    %223 = vset.pattern.permute.xlu0 0
    %224 = vperm.xlu0 %223, %v66
    %v225 = vpop.permute.xlu0 %224
    %vm227 = vcmask 261120
    %v229 = vsel %vm227, %v47, 0
    %v232 = vsel %vm227, %v48, 0
    %v235 = vsel %vm227, %v49, 0
    %v238 = vsel %vm227, %v50, 0
    %240 = vmatprep.subr.mxu0 0.0
    %241 = vmatpush1.msra.mxu0 0.0
    %242 = vmatprep.subr.mxu0 0.0
    %243 = vmatpush1.msra.mxu0 0.0
    %244 = vmatprep.subr.mxu0 0.0
    %245 = vmatpush1.msra.mxu0 0.0
    %246 = vmatprep.subr.mxu0 0.0
    %247 = vmatpush1.msra.mxu0 0.0
    %248 = vmatprep.subr.mxu0 0.0
    %249 = vmatpush1.msra.mxu0 0.0
    %250 = vmatprep.subr.mxu0 0.0
    %251 = vmatpush1.msra.mxu0 0.0
    %252 = vmatprep.subr.mxu0 0.0
    %253 = vmatpush1.msra.mxu0 0.0
    %254 = vmatprep.subr.mxu0 0.0
    %255 = vmatpush1.msra.mxu0 0.0
    %256 = vmatprep.subr.mxu0 0.0
    %257 = vmatpush1.msra.mxu0 0.0
    %258 = vmatprep.subr.mxu0 0.0
    %259 = vmatpush1.msra.mxu0 0.0
    %260 = vmatprep.subr.mxu0 0.0
    %261 = vmatpush1.msra.mxu0 0.0
    %262 = vmatprep.subr.mxu0 0.0
    %263 = vmatpush1.msra.mxu0 0.0
    %264 = vmatprep.subr.mxu0 0.0
    %265 = vmatpush1.msra.mxu0 %v206
    %266 = vmatprep.subr.mxu0 0.0
    %267 = vmatpush1.msra.mxu0 %v205
    %268 = vmatprep.subr.mxu0 0.0
    %269 = vmatpush1.msra.mxu0 %v204
    %270 = vmatprep.subr.mxu0 0.0
    %271 = vmatpush1.msra.mxu0 %v203
    %272 = vmatprep.subr.mxu0 0.0
    %273 = vmatpush2.msra.mxu0 0.0
    %274 = vmatprep.subr.mxu0 0.0
    %275 = vmatpush2.msra.mxu0 0.0
    %276 = vmatprep.subr.mxu0 0.0
    %277 = vmatpush2.msra.mxu0 0.0
    %278 = vmatprep.subr.mxu0 0.0
    %279 = vmatpush2.msra.mxu0 0.0
    %280 = vmatprep.subr.mxu0 0.0
    %281 = vmatpush2.msra.mxu0 0.0
    %282 = vmatprep.subr.mxu0 0.0
    %283 = vmatpush2.msra.mxu0 0.0
    %284 = vmatprep.subr.mxu0 0.0
    %285 = vmatpush2.msra.mxu0 0.0
    %286 = vmatprep.subr.mxu0 0.0
    %287 = vmatpush2.msra.mxu0 0.0
    %288 = vmatprep.subr.mxu0 0.0
    %289 = vmatpush2.msra.mxu0 0.0
    %290 = vmatprep.subr.mxu0 0.0
    %291 = vmatpush2.msra.mxu0 0.0
    %292 = vmatprep.subr.mxu0 0.0
    %293 = vmatpush2.msra.mxu0 0.0
    %294 = vmatprep.subr.mxu0 0.0
    %295 = vmatpush2.msra.mxu0 0.0
    %296 = vmatprep.subr.mxu0 0.0
    %297 = vmatpush2.msra.mxu0 0.0
    %298 = vmatprep.subr.mxu0 0.0
    %299 = vmatpush2.msra.mxu0 0.0
    %300 = vmatprep.subr.mxu0 0.0
    %301 = vmatpush2.msra.mxu0 0.0
    %302 = vmatprep.subr.mxu0 0.0
    %303 = vmatpush2.msra.mxu0 0.0
    %304 = vmatprep.mubr.f32.mxu0 0.0
    %305 = vmatmul.mubr.f32.gmra.mxu0 %v229
    %v306 = vpop.f32.mrf.mxu0
    %v307 = vadd.f32 %v210, %v306
    %v308 = vpop.f32.mrf.mxu0
    %309 = vmatprep.mubr.f32.mxu0 0.0
    %310 = vmatmul.mubr.f32.gmra.mxu0 %v232
    %v311 = vpop.f32.mrf.mxu0
    %v312 = vadd.f32 %v215, %v311
    %v313 = vpop.f32.mrf.mxu0
    %314 = vmatprep.mubr.f32.mxu0 0.0
    %315 = vmatmul.mubr.f32.gmra.mxu0 %v235
    %v316 = vpop.f32.mrf.mxu0
    %v317 = vadd.f32 %v220, %v316
    %v318 = vpop.f32.mrf.mxu0
    %319 = vmatprep.mubr.f32.mxu0 0.0
    %320 = vmatmul.mubr.f32.gmra.mxu0 %v238
    %v321 = vpop.f32.mrf.mxu0
    %v322 = vadd.f32 %v225, %v321
    %v323 = vpop.f32.mrf.mxu0
    %324 = vdwg.mxu0
    %v325 = vmul.f32 %v307, 0.35355338
    %v326 = vmul.f32 %v312, 0.35355338
    %v327 = vmul.f32 %v317, 0.35355338
    %v328 = vmul.f32 %v322, 0.35355338
    %330 = vset.pattern.permute.xlu0 0
    %331 = vperm.xlu0 %330, %v67
    %v332 = vpop.permute.xlu0 %331
    %335 = vset.pattern.permute.xlu0 0
    %336 = vperm.xlu0 %335, %v68
    %v337 = vpop.permute.xlu0 %336
    %340 = vset.pattern.permute.xlu0 0
    %341 = vperm.xlu0 %340, %v69
    %v342 = vpop.permute.xlu0 %341
    %345 = vset.pattern.permute.xlu0 0
    %346 = vperm.xlu0 %345, %v70
    %v347 = vpop.permute.xlu0 %346
    %v350 = vsel %vm227, %v51, 0
    %v353 = vsel %vm227, %v52, 0
    %v356 = vsel %vm227, %v53, 0
    %v359 = vsel %vm227, %v54, 0
    %361 = vmatprep.subr.mxu0 0.0
    %362 = vmatpush1.msra.mxu0 0.0
    %363 = vmatprep.subr.mxu0 0.0
    %364 = vmatpush1.msra.mxu0 0.0
    %365 = vmatprep.subr.mxu0 0.0
    %366 = vmatpush1.msra.mxu0 0.0
    %367 = vmatprep.subr.mxu0 0.0
    %368 = vmatpush1.msra.mxu0 0.0
    %369 = vmatprep.subr.mxu0 0.0
    %370 = vmatpush1.msra.mxu0 0.0
    %371 = vmatprep.subr.mxu0 0.0
    %372 = vmatpush1.msra.mxu0 0.0
    %373 = vmatprep.subr.mxu0 0.0
    %374 = vmatpush1.msra.mxu0 0.0
    %375 = vmatprep.subr.mxu0 0.0
    %376 = vmatpush1.msra.mxu0 0.0
    %377 = vmatprep.subr.mxu0 0.0
    %378 = vmatpush1.msra.mxu0 0.0
    %379 = vmatprep.subr.mxu0 0.0
    %380 = vmatpush1.msra.mxu0 0.0
    %381 = vmatprep.subr.mxu0 0.0
    %382 = vmatpush1.msra.mxu0 0.0
    %383 = vmatprep.subr.mxu0 0.0
    %384 = vmatpush1.msra.mxu0 0.0
    %385 = vmatprep.subr.mxu0 0.0
    %386 = vmatpush1.msra.mxu0 %v206
    %387 = vmatprep.subr.mxu0 0.0
    %388 = vmatpush1.msra.mxu0 %v205
    %389 = vmatprep.subr.mxu0 0.0
    %390 = vmatpush1.msra.mxu0 %v204
    %391 = vmatprep.subr.mxu0 0.0
    %392 = vmatpush1.msra.mxu0 %v203
    %393 = vmatprep.subr.mxu0 0.0
    %394 = vmatpush2.msra.mxu0 0.0
    %395 = vmatprep.subr.mxu0 0.0
    %396 = vmatpush2.msra.mxu0 0.0
    %397 = vmatprep.subr.mxu0 0.0
    %398 = vmatpush2.msra.mxu0 0.0
    %399 = vmatprep.subr.mxu0 0.0
    %400 = vmatpush2.msra.mxu0 0.0
    %401 = vmatprep.subr.mxu0 0.0
    %402 = vmatpush2.msra.mxu0 0.0
    %403 = vmatprep.subr.mxu0 0.0
    %404 = vmatpush2.msra.mxu0 0.0
    %405 = vmatprep.subr.mxu0 0.0
    %406 = vmatpush2.msra.mxu0 0.0
    %407 = vmatprep.subr.mxu0 0.0
    %408 = vmatpush2.msra.mxu0 0.0
    %409 = vmatprep.subr.mxu0 0.0
    %410 = vmatpush2.msra.mxu0 0.0
    %411 = vmatprep.subr.mxu0 0.0
    %412 = vmatpush2.msra.mxu0 0.0
    %413 = vmatprep.subr.mxu0 0.0
    %414 = vmatpush2.msra.mxu0 0.0
    %415 = vmatprep.subr.mxu0 0.0
    %416 = vmatpush2.msra.mxu0 0.0
    %417 = vmatprep.subr.mxu0 0.0
    %418 = vmatpush2.msra.mxu0 0.0
    %419 = vmatprep.subr.mxu0 0.0
    %420 = vmatpush2.msra.mxu0 0.0
    %421 = vmatprep.subr.mxu0 0.0
    %422 = vmatpush2.msra.mxu0 0.0
    %423 = vmatprep.subr.mxu0 0.0
    %424 = vmatpush2.msra.mxu0 0.0
    %425 = vmatprep.mubr.f32.mxu0 0.0
    %426 = vmatmul.mubr.f32.gmra.mxu0 %v350
    %v427 = vpop.f32.mrf.mxu0
    %v428 = vadd.f32 %v332, %v427
    %v429 = vpop.f32.mrf.mxu0
    %430 = vmatprep.mubr.f32.mxu0 0.0
    %431 = vmatmul.mubr.f32.gmra.mxu0 %v353
    %v432 = vpop.f32.mrf.mxu0
    %v433 = vadd.f32 %v337, %v432
    %v434 = vpop.f32.mrf.mxu0
    %435 = vmatprep.mubr.f32.mxu0 0.0
    %436 = vmatmul.mubr.f32.gmra.mxu0 %v356
    %v437 = vpop.f32.mrf.mxu0
    %v438 = vadd.f32 %v342, %v437
    %v439 = vpop.f32.mrf.mxu0
    %440 = vmatprep.mubr.f32.mxu0 0.0
    %441 = vmatmul.mubr.f32.gmra.mxu0 %v359
    %v442 = vpop.f32.mrf.mxu0
    %v443 = vadd.f32 %v347, %v442
    %v444 = vpop.f32.mrf.mxu0
    %445 = vdwg.mxu0
    %447 = vset.pattern.permute.xlu0 0
    %448 = vperm.xlu0 %447, %v71
    %v449 = vpop.permute.xlu0 %448
    %452 = vset.pattern.permute.xlu0 0
    %453 = vperm.xlu0 %452, %v72
    %v454 = vpop.permute.xlu0 %453
    %457 = vset.pattern.permute.xlu0 0
    %458 = vperm.xlu0 %457, %v73
    %v459 = vpop.permute.xlu0 %458
    %462 = vset.pattern.permute.xlu0 0
    %463 = vperm.xlu0 %462, %v74
    %v464 = vpop.permute.xlu0 %463
    %v467 = vsel %vm227, %v55, 0
    %v470 = vsel %vm227, %v56, 0
    %v473 = vsel %vm227, %v57, 0
    %v476 = vsel %vm227, %v58, 0
    %478 = vmatprep.subr.mxu0 0.0
    %479 = vmatpush1.msra.mxu0 0.0
    %480 = vmatprep.subr.mxu0 0.0
    %481 = vmatpush1.msra.mxu0 0.0
    %482 = vmatprep.subr.mxu0 0.0
    %483 = vmatpush1.msra.mxu0 0.0
    %484 = vmatprep.subr.mxu0 0.0
    %485 = vmatpush1.msra.mxu0 0.0
    %486 = vmatprep.subr.mxu0 0.0
    %487 = vmatpush1.msra.mxu0 0.0
    %488 = vmatprep.subr.mxu0 0.0
    %489 = vmatpush1.msra.mxu0 0.0
    %490 = vmatprep.subr.mxu0 0.0
    %491 = vmatpush1.msra.mxu0 0.0
    %492 = vmatprep.subr.mxu0 0.0
    %493 = vmatpush1.msra.mxu0 0.0
    %494 = vmatprep.subr.mxu0 0.0
    %495 = vmatpush1.msra.mxu0 0.0
    %496 = vmatprep.subr.mxu0 0.0
    %497 = vmatpush1.msra.mxu0 0.0
    %498 = vmatprep.subr.mxu0 0.0
    %499 = vmatpush1.msra.mxu0 0.0
    %500 = vmatprep.subr.mxu0 0.0
    %501 = vmatpush1.msra.mxu0 0.0
    %502 = vmatprep.subr.mxu0 0.0
    %503 = vmatpush1.msra.mxu0 %v206
    %504 = vmatprep.subr.mxu0 0.0
    %505 = vmatpush1.msra.mxu0 %v205
    %506 = vmatprep.subr.mxu0 0.0
    %507 = vmatpush1.msra.mxu0 %v204
    %508 = vmatprep.subr.mxu0 0.0
    %509 = vmatpush1.msra.mxu0 %v203
    %510 = vmatprep.subr.mxu0 0.0
    %511 = vmatpush2.msra.mxu0 0.0
    %512 = vmatprep.subr.mxu0 0.0
    %513 = vmatpush2.msra.mxu0 0.0
    %514 = vmatprep.subr.mxu0 0.0
    %515 = vmatpush2.msra.mxu0 0.0
    %516 = vmatprep.subr.mxu0 0.0
    %517 = vmatpush2.msra.mxu0 0.0
    %518 = vmatprep.subr.mxu0 0.0
    %519 = vmatpush2.msra.mxu0 0.0
    %520 = vmatprep.subr.mxu0 0.0
    %521 = vmatpush2.msra.mxu0 0.0
    %522 = vmatprep.subr.mxu0 0.0
    %523 = vmatpush2.msra.mxu0 0.0
    %524 = vmatprep.subr.mxu0 0.0
    %525 = vmatpush2.msra.mxu0 0.0
    %526 = vmatprep.subr.mxu0 0.0
    %527 = vmatpush2.msra.mxu0 0.0
    %528 = vmatprep.subr.mxu0 0.0
    %529 = vmatpush2.msra.mxu0 0.0
    %530 = vmatprep.subr.mxu0 0.0
    %531 = vmatpush2.msra.mxu0 0.0
    %532 = vmatprep.subr.mxu0 0.0
    %533 = vmatpush2.msra.mxu0 0.0
    %534 = vmatprep.subr.mxu0 0.0
    %535 = vmatpush2.msra.mxu0 0.0
    %536 = vmatprep.subr.mxu0 0.0
    %537 = vmatpush2.msra.mxu0 0.0
    %538 = vmatprep.subr.mxu0 0.0
    %539 = vmatpush2.msra.mxu0 0.0
    %540 = vmatprep.subr.mxu0 0.0
    %541 = vmatpush2.msra.mxu0 0.0
    %542 = vmatprep.mubr.f32.mxu0 0.0
    %543 = vmatmul.mubr.f32.gmra.mxu0 %v467
    %v544 = vpop.f32.mrf.mxu0
    %v545 = vadd.f32 %v449, %v544
    %v546 = vpop.f32.mrf.mxu0
    %547 = vmatprep.mubr.f32.mxu0 0.0
    %548 = vmatmul.mubr.f32.gmra.mxu0 %v470
    %v549 = vpop.f32.mrf.mxu0
    %v550 = vadd.f32 %v454, %v549
    %v551 = vpop.f32.mrf.mxu0
    %552 = vmatprep.mubr.f32.mxu0 0.0
    %553 = vmatmul.mubr.f32.gmra.mxu0 %v473
    %v554 = vpop.f32.mrf.mxu0
    %v555 = vadd.f32 %v459, %v554
    %v556 = vpop.f32.mrf.mxu0
    %557 = vmatprep.mubr.f32.mxu0 0.0
    %558 = vmatmul.mubr.f32.gmra.mxu0 %v476
    %v559 = vpop.f32.mrf.mxu0
    %v560 = vadd.f32 %v464, %v559
    %v561 = vpop.f32.mrf.mxu0
    %562 = vdwg.mxu0
    %567 = vrot.lane.b32.xlu0 %v428, 64
    %v568 = vpop.permute.xlu0 %567
    %569 = vrot.lane.b32.xlu0 %v433, 64
    %v570 = vpop.permute.xlu0 %569
    %571 = vrot.lane.b32.xlu0 %v438, 64
    %v572 = vpop.permute.xlu0 %571
    %573 = vrot.lane.b32.xlu0 %v443, 64
    %v574 = vpop.permute.xlu0 %573
    %v579 = vsel %vm93, %v428, %v568
    %v580 = vsel %vm93, %v433, %v570
    %v581 = vsel %vm93, %v438, %v572
    %v582 = vsel %vm93, %v443, %v574
    %v583 = vmul.f32 %v579, %v79
    %v584 = vmul.f32 %v579, %v80
    %v585 = vmul.f32 %v580, %v81
    %v586 = vmul.f32 %v580, %v82
    %v587 = vmul.f32 %v581, %v83
    %v588 = vmul.f32 %v581, %v84
    %v589 = vmul.f32 %v582, %v85
    %v590 = vmul.f32 %v582, %v86
    %595 = vrot.lane.b32.xlu0 %v545, 64
    %v596 = vpop.permute.xlu0 %595
    %597 = vrot.lane.b32.xlu0 %v550, 64
    %v598 = vpop.permute.xlu0 %597
    %599 = vrot.lane.b32.xlu0 %v555, 64
    %v600 = vpop.permute.xlu0 %599
    %601 = vrot.lane.b32.xlu0 %v560, 64
    %v602 = vpop.permute.xlu0 %601
    %v607 = vsel %vm93, %v545, %v596
    %v608 = vsel %vm93, %v550, %v598
    %v609 = vsel %vm93, %v555, %v600
    %v610 = vsel %vm93, %v560, %v602
    %v611 = vmul.f32 %v607, %v79
    %v612 = vmul.f32 %v607, %v80
    %v613 = vmul.f32 %v608, %v81
    %v614 = vmul.f32 %v608, %v82
    %v615 = vmul.f32 %v609, %v83
    %v616 = vmul.f32 %v609, %v84
    %v617 = vmul.f32 %v610, %v85
    %v618 = vmul.f32 %v610, %v86
    %619 = vxpose.xlu0.b32.start [1/16] %v325, 128
    %620 = vxpose.xlu0.b32.cont [2/16] %v326, 128
    %621 = vxpose.xlu0.b32.cont [3/16] %v327, 128
    %622 = vxpose.xlu0.b32.cont [4/16] %v328, 128
    %623 = vxpose.xlu0.b32.cont [5/16] 0.0, 128
    %624 = vxpose.xlu0.b32.cont [6/16] 0.0, 128
    %625 = vxpose.xlu0.b32.cont [7/16] 0.0, 128
    %626 = vxpose.xlu0.b32.cont [8/16] 0.0, 128
    %627 = vxpose.xlu0.b32.cont [9/16] 0.0, 128
    %628 = vxpose.xlu0.b32.cont [10/16] 0.0, 128
    %629 = vxpose.xlu0.b32.cont [11/16] 0.0, 128
    %630 = vxpose.xlu0.b32.cont [12/16] 0.0, 128
    %631 = vxpose.xlu0.b32.cont [13/16] 0.0, 128
    %632 = vxpose.xlu0.b32.cont [14/16] 0.0, 128
    %633 = vxpose.xlu0.b32.cont [15/16] 0.0, 128
    %634 = vxpose.xlu0.b32.end [16/16] 0.0, 128
    %v635 = vpop.trf.xlu0
    %v636 = vpop.trf.xlu0
    %v637 = vpop.trf.xlu0
    %v638 = vpop.trf.xlu0
    %v639 = vpop.trf.xlu0
    %v640 = vpop.trf.xlu0
    %v641 = vpop.trf.xlu0
    %v642 = vpop.trf.xlu0
    %v643 = vpop.trf.xlu0
    %v644 = vpop.trf.xlu0
    %v645 = vpop.trf.xlu0
    %v646 = vpop.trf.xlu0
    %v647 = vpop.trf.xlu0
    %v648 = vpop.trf.xlu0
    %v649 = vpop.trf.xlu0
    %v650 = vpop.trf.xlu0
    %v652 = vsel %vm227, %v635, 0
    %v655 = vsel %vm227, %v636, 0
    %v658 = vsel %vm227, %v637, 0
    %v661 = vsel %vm227, %v638, 0
    %v664 = vsel %vm227, %v639, 0
    %v667 = vsel %vm227, %v640, 0
    %v670 = vsel %vm227, %v641, 0
    %v673 = vsel %vm227, %v642, 0
    %675 = vmatprep.subr.mxu0 0.0
    %676 = vmatpush1.msra.mxu0 0.0
    %677 = vmatprep.subr.mxu0 0.0
    %678 = vmatpush1.msra.mxu0 0.0
    %679 = vmatprep.subr.mxu0 0.0
    %680 = vmatpush1.msra.mxu0 0.0
    %681 = vmatprep.subr.mxu0 0.0
    %682 = vmatpush1.msra.mxu0 0.0
    %683 = vmatprep.subr.mxu0 0.0
    %684 = vmatpush1.msra.mxu0 0.0
    %685 = vmatprep.subr.mxu0 0.0
    %686 = vmatpush1.msra.mxu0 0.0
    %687 = vmatprep.subr.mxu0 0.0
    %688 = vmatpush1.msra.mxu0 0.0
    %689 = vmatprep.subr.mxu0 0.0
    %690 = vmatpush1.msra.mxu0 0.0
    %691 = vmatprep.subr.mxu0 0.0
    %692 = vmatpush1.msra.mxu0 0.0
    %693 = vmatprep.subr.mxu0 0.0
    %694 = vmatpush1.msra.mxu0 0.0
    %695 = vmatprep.subr.mxu0 0.0
    %696 = vmatpush1.msra.mxu0 0.0
    %697 = vmatprep.subr.mxu0 0.0
    %698 = vmatpush1.msra.mxu0 0.0
    %699 = vmatprep.subr.mxu0 %v590
    %700 = vmatpush1.msra.mxu0 %v589
    %701 = vmatprep.subr.mxu0 %v588
    %702 = vmatpush1.msra.mxu0 %v587
    %703 = vmatprep.subr.mxu0 %v586
    %704 = vmatpush1.msra.mxu0 %v585
    %705 = vmatprep.subr.mxu0 %v584
    %706 = vmatpush1.msra.mxu0 %v583
    %707 = vmatprep.subr.mxu0 0.0
    %708 = vmatpush2.msra.mxu0 0.0
    %709 = vmatprep.subr.mxu0 0.0
    %710 = vmatpush2.msra.mxu0 0.0
    %711 = vmatprep.subr.mxu0 0.0
    %712 = vmatpush2.msra.mxu0 0.0
    %713 = vmatprep.subr.mxu0 0.0
    %714 = vmatpush2.msra.mxu0 0.0
    %715 = vmatprep.subr.mxu0 0.0
    %716 = vmatpush2.msra.mxu0 0.0
    %717 = vmatprep.subr.mxu0 0.0
    %718 = vmatpush2.msra.mxu0 0.0
    %719 = vmatprep.subr.mxu0 0.0
    %720 = vmatpush2.msra.mxu0 0.0
    %721 = vmatprep.subr.mxu0 0.0
    %722 = vmatpush2.msra.mxu0 0.0
    %723 = vmatprep.subr.mxu0 0.0
    %724 = vmatpush2.msra.mxu0 0.0
    %725 = vmatprep.subr.mxu0 0.0
    %726 = vmatpush2.msra.mxu0 0.0
    %727 = vmatprep.subr.mxu0 0.0
    %728 = vmatpush2.msra.mxu0 0.0
    %729 = vmatprep.subr.mxu0 0.0
    %730 = vmatpush2.msra.mxu0 0.0
    %731 = vmatprep.subr.mxu0 0.0
    %732 = vmatpush2.msra.mxu0 0.0
    %733 = vmatprep.subr.mxu0 0.0
    %734 = vmatpush2.msra.mxu0 0.0
    %735 = vmatprep.subr.mxu0 0.0
    %736 = vmatpush2.msra.mxu0 0.0
    %737 = vmatprep.subr.mxu0 0.0
    %738 = vmatpush2.msra.mxu0 0.0
    %739 = vmatprep.mubr.f32.mxu0 0.0
    %740 = vmatmul.mubr.f32.gmra.mxu0 %v652
    %v741 = vpop.f32.mrf.mxu0
    %v742 = vadd.f32 0.0, %v741
    %v743 = vpop.f32.mrf.mxu0
    %v744 = vadd.f32 0.0, %v743
    %745 = vmatprep.mubr.f32.mxu0 0.0
    %746 = vmatmul.mubr.f32.gmra.mxu0 %v655
    %v747 = vpop.f32.mrf.mxu0
    %v748 = vadd.f32 0.0, %v747
    %v749 = vpop.f32.mrf.mxu0
    %v750 = vadd.f32 0.0, %v749
    %751 = vmatprep.mubr.f32.mxu0 0.0
    %752 = vmatmul.mubr.f32.gmra.mxu0 %v658
    %v753 = vpop.f32.mrf.mxu0
    %v754 = vadd.f32 0.0, %v753
    %v755 = vpop.f32.mrf.mxu0
    %v756 = vadd.f32 0.0, %v755
    %757 = vmatprep.mubr.f32.mxu0 0.0
    %758 = vmatmul.mubr.f32.gmra.mxu0 %v661
    %v759 = vpop.f32.mrf.mxu0
    %v760 = vadd.f32 0.0, %v759
    %v761 = vpop.f32.mrf.mxu0
    %v762 = vadd.f32 0.0, %v761
    %763 = vmatprep.mubr.f32.mxu0 0.0
    %764 = vmatmul.mubr.f32.gmra.mxu0 %v664
    %v765 = vpop.f32.mrf.mxu0
    %v766 = vadd.f32 0.0, %v765
    %v767 = vpop.f32.mrf.mxu0
    %v768 = vadd.f32 0.0, %v767
    %769 = vmatprep.mubr.f32.mxu0 0.0
    %770 = vmatmul.mubr.f32.gmra.mxu0 %v667
    %v771 = vpop.f32.mrf.mxu0
    %v772 = vadd.f32 0.0, %v771
    %v773 = vpop.f32.mrf.mxu0
    %v774 = vadd.f32 0.0, %v773
    %775 = vmatprep.mubr.f32.mxu0 0.0
    %776 = vmatmul.mubr.f32.gmra.mxu0 %v670
    %v777 = vpop.f32.mrf.mxu0
    %v778 = vadd.f32 0.0, %v777
    %v779 = vpop.f32.mrf.mxu0
    %v780 = vadd.f32 0.0, %v779
    %781 = vmatprep.mubr.f32.mxu0 0.0
    %782 = vmatmul.mubr.f32.gmra.mxu0 %v673
    %v783 = vpop.f32.mrf.mxu0
    %v784 = vadd.f32 0.0, %v783
    %v785 = vpop.f32.mrf.mxu0
    %v786 = vadd.f32 0.0, %v785
    %787 = vdwg.mxu0
    %v788 = vmax.f32 %v742, %v744
    %789 = vmax.xlane.f32.xlu0 %v788
    %v790 = vpop.xlane.xlu0 %789
    %v791 = vmax.f32 %v748, %v750
    %792 = vmax.xlane.f32.xlu0 %v791
    %v793 = vpop.xlane.xlu0 %792
    %v794 = vmax.f32 %v754, %v756
    %795 = vmax.xlane.f32.xlu0 %v794
    %v796 = vpop.xlane.xlu0 %795
    %v797 = vmax.f32 %v760, %v762
    %798 = vmax.xlane.f32.xlu0 %v797
    %v799 = vpop.xlane.xlu0 %798
    %v800 = vmax.f32 %v766, %v768
    %801 = vmax.xlane.f32.xlu0 %v800
    %v802 = vpop.xlane.xlu0 %801
    %v803 = vmax.f32 %v772, %v774
    %804 = vmax.xlane.f32.xlu0 %v803
    %v805 = vpop.xlane.xlu0 %804
    %v806 = vmax.f32 %v778, %v780
    %807 = vmax.xlane.f32.xlu0 %v806
    %v808 = vpop.xlane.xlu0 %807
    %v809 = vmax.f32 %v784, %v786
    %810 = vmax.xlane.f32.xlu0 %v809
    %v811 = vpop.xlane.xlu0 %810
    %v812 = vsub.f32 %v742, %v790
    %v813 = vsub.f32 %v744, %v790
    %v814 = vsub.f32 %v748, %v793
    %v815 = vsub.f32 %v750, %v793
    %v816 = vsub.f32 %v754, %v796
    %v817 = vsub.f32 %v756, %v796
    %v818 = vsub.f32 %v760, %v799
    %v819 = vsub.f32 %v762, %v799
    %v820 = vsub.f32 %v766, %v802
    %v821 = vsub.f32 %v768, %v802
    %v822 = vsub.f32 %v772, %v805
    %v823 = vsub.f32 %v774, %v805
    %v824 = vsub.f32 %v778, %v808
    %v825 = vsub.f32 %v780, %v808
    %v826 = vsub.f32 %v784, %v811
    %v827 = vsub.f32 %v786, %v811
    %v828 = vmul.f32 %v812, 1.442695
    %v829 = vpow.pop %v828
    %v830 = vmul.f32 %v813, 1.442695
    %v831 = vpow.pop %v830
    %v832 = vmul.f32 %v814, 1.442695
    %v833 = vpow.pop %v832
    %v834 = vmul.f32 %v815, 1.442695
    %v835 = vpow.pop %v834
    %v836 = vmul.f32 %v816, 1.442695
    %v837 = vpow.pop %v836
    %v838 = vmul.f32 %v817, 1.442695
    %v839 = vpow.pop %v838
    %v840 = vmul.f32 %v818, 1.442695
    %v841 = vpow.pop %v840
    %v842 = vmul.f32 %v819, 1.442695
    %v843 = vpow.pop %v842
    %v844 = vmul.f32 %v820, 1.442695
    %v845 = vpow.pop %v844
    %v846 = vmul.f32 %v821, 1.442695
    %v847 = vpow.pop %v846
    %v848 = vmul.f32 %v822, 1.442695
    %v849 = vpow.pop %v848
    %v850 = vmul.f32 %v823, 1.442695
    %v851 = vpow.pop %v850
    %v852 = vmul.f32 %v824, 1.442695
    %v853 = vpow.pop %v852
    %v854 = vmul.f32 %v825, 1.442695
    %v855 = vpow.pop %v854
    %v856 = vmul.f32 %v826, 1.442695
    %v857 = vpow.pop %v856
    %v858 = vmul.f32 %v827, 1.442695
    %v859 = vpow.pop %v858
    %860 = vmatprep.subr.mxu0 0.0
    %861 = vmatpush1.xpose.msra.mxu0 0.0
    %862 = vmatprep.subr.mxu0 0.0
    %863 = vmatpush1.xpose.msra.mxu0 0.0
    %864 = vmatprep.subr.mxu0 0.0
    %865 = vmatpush1.xpose.msra.mxu0 0.0
    %866 = vmatprep.subr.mxu0 0.0
    %867 = vmatpush1.xpose.msra.mxu0 0.0
    %868 = vmatprep.subr.mxu0 0.0
    %869 = vmatpush1.xpose.msra.mxu0 0.0
    %870 = vmatprep.subr.mxu0 0.0
    %871 = vmatpush1.xpose.msra.mxu0 0.0
    %872 = vmatprep.subr.mxu0 0.0
    %873 = vmatpush1.xpose.msra.mxu0 0.0
    %874 = vmatprep.subr.mxu0 0.0
    %875 = vmatpush1.xpose.msra.mxu0 0.0
    %876 = vmatprep.subr.mxu0 %v859
    %877 = vmatpush1.xpose.msra.mxu0 %v857
    %878 = vmatprep.subr.mxu0 %v855
    %879 = vmatpush1.xpose.msra.mxu0 %v853
    %880 = vmatprep.subr.mxu0 %v851
    %881 = vmatpush1.xpose.msra.mxu0 %v849
    %882 = vmatprep.subr.mxu0 %v847
    %883 = vmatpush1.xpose.msra.mxu0 %v845
    %884 = vmatprep.subr.mxu0 %v843
    %885 = vmatpush1.xpose.msra.mxu0 %v841
    %886 = vmatprep.subr.mxu0 %v839
    %887 = vmatpush1.xpose.msra.mxu0 %v837
    %888 = vmatprep.subr.mxu0 %v835
    %889 = vmatpush1.xpose.msra.mxu0 %v833
    %890 = vmatprep.subr.mxu0 %v831
    %891 = vmatpush1.xpose.msra.mxu0 %v829
    %892 = vmatprep.subr.mxu0 0.0
    %893 = vmatpush2.xpose.msra.mxu0 0.0
    %894 = vmatprep.subr.mxu0 0.0
    %895 = vmatpush2.xpose.msra.mxu0 0.0
    %896 = vmatprep.subr.mxu0 0.0
    %897 = vmatpush2.xpose.msra.mxu0 0.0
    %898 = vmatprep.subr.mxu0 0.0
    %899 = vmatpush2.xpose.msra.mxu0 0.0
    %900 = vmatprep.subr.mxu0 0.0
    %901 = vmatpush2.xpose.msra.mxu0 0.0
    %902 = vmatprep.subr.mxu0 0.0
    %903 = vmatpush2.xpose.msra.mxu0 0.0
    %904 = vmatprep.subr.mxu0 0.0
    %905 = vmatpush2.xpose.msra.mxu0 0.0
    %906 = vmatprep.subr.mxu0 0.0
    %907 = vmatpush2.xpose.msra.mxu0 0.0
    %908 = vmatprep.subr.mxu0 0.0
    %909 = vmatpush2.xpose.msra.mxu0 0.0
    %910 = vmatprep.subr.mxu0 0.0
    %911 = vmatpush2.xpose.msra.mxu0 0.0
    %912 = vmatprep.subr.mxu0 0.0
    %913 = vmatpush2.xpose.msra.mxu0 0.0
    %914 = vmatprep.subr.mxu0 0.0
    %915 = vmatpush2.xpose.msra.mxu0 0.0
    %916 = vmatprep.subr.mxu0 0.0
    %917 = vmatpush2.xpose.msra.mxu0 0.0
    %918 = vmatprep.subr.mxu0 0.0
    %919 = vmatpush2.xpose.msra.mxu0 0.0
    %920 = vmatprep.subr.mxu0 0.0
    %921 = vmatpush2.xpose.msra.mxu0 0.0
    %922 = vmatprep.subr.mxu0 0.0
    %923 = vmatpush2.xpose.msra.mxu0 0.0
    %924 = vmatprep.mubr.f32.mxu0 %v612
    %925 = vmatmul.mubr.f32.gmra.mxu0 %v611
    %v926 = vpop.f32.mrf.mxu0
    %v927 = vadd.f32 0.0, %v926
    %v928 = vpop.f32.mrf.mxu0
    %929 = vmatprep.mubr.f32.mxu0 %v614
    %930 = vmatmul.mubr.f32.gmra.mxu0 %v613
    %v931 = vpop.f32.mrf.mxu0
    %v932 = vadd.f32 0.0, %v931
    %v933 = vpop.f32.mrf.mxu0
    %934 = vmatprep.mubr.f32.mxu0 %v616
    %935 = vmatmul.mubr.f32.gmra.mxu0 %v615
    %v936 = vpop.f32.mrf.mxu0
    %v937 = vadd.f32 0.0, %v936
    %v938 = vpop.f32.mrf.mxu0
    %939 = vmatprep.mubr.f32.mxu0 %v618
    %940 = vmatmul.mubr.f32.gmra.mxu0 %v617
    %v941 = vpop.f32.mrf.mxu0
    %v942 = vadd.f32 0.0, %v941
    %v943 = vpop.f32.mrf.mxu0
    %944 = vdwg.mxu0
    %945 = vmatprep.subr.mxu0 0.0
    %946 = vmatpush1.xpose.msra.mxu0 0.0
    %947 = vmatprep.subr.mxu0 0.0
    %948 = vmatpush1.xpose.msra.mxu0 0.0
    %949 = vmatprep.subr.mxu0 0.0
    %950 = vmatpush1.xpose.msra.mxu0 0.0
    %951 = vmatprep.subr.mxu0 0.0
    %952 = vmatpush1.xpose.msra.mxu0 0.0
    %953 = vmatprep.subr.mxu0 0.0
    %954 = vmatpush1.xpose.msra.mxu0 0.0
    %955 = vmatprep.subr.mxu0 0.0
    %956 = vmatpush1.xpose.msra.mxu0 0.0
    %957 = vmatprep.subr.mxu0 0.0
    %958 = vmatpush1.xpose.msra.mxu0 0.0
    %959 = vmatprep.subr.mxu0 0.0
    %960 = vmatpush1.xpose.msra.mxu0 0.0
    %961 = vmatprep.subr.mxu0 %v859
    %962 = vmatpush1.xpose.msra.mxu0 %v857
    %963 = vmatprep.subr.mxu0 %v855
    %964 = vmatpush1.xpose.msra.mxu0 %v853
    %965 = vmatprep.subr.mxu0 %v851
    %966 = vmatpush1.xpose.msra.mxu0 %v849
    %967 = vmatprep.subr.mxu0 %v847
    %968 = vmatpush1.xpose.msra.mxu0 %v845
    %969 = vmatprep.subr.mxu0 %v843
    %970 = vmatpush1.xpose.msra.mxu0 %v841
    %971 = vmatprep.subr.mxu0 %v839
    %972 = vmatpush1.xpose.msra.mxu0 %v837
    %973 = vmatprep.subr.mxu0 %v835
    %974 = vmatpush1.xpose.msra.mxu0 %v833
    %975 = vmatprep.subr.mxu0 %v831
    %976 = vmatpush1.xpose.msra.mxu0 %v829
    %977 = vmatprep.subr.mxu0 0.0
    %978 = vmatpush2.xpose.msra.mxu0 0.0
    %979 = vmatprep.subr.mxu0 0.0
    %980 = vmatpush2.xpose.msra.mxu0 0.0
    %981 = vmatprep.subr.mxu0 0.0
    %982 = vmatpush2.xpose.msra.mxu0 0.0
    %983 = vmatprep.subr.mxu0 0.0
    %984 = vmatpush2.xpose.msra.mxu0 0.0
    %985 = vmatprep.subr.mxu0 0.0
    %986 = vmatpush2.xpose.msra.mxu0 0.0
    %987 = vmatprep.subr.mxu0 0.0
    %988 = vmatpush2.xpose.msra.mxu0 0.0
    %989 = vmatprep.subr.mxu0 0.0
    %990 = vmatpush2.xpose.msra.mxu0 0.0
    %991 = vmatprep.subr.mxu0 0.0
    %992 = vmatpush2.xpose.msra.mxu0 0.0
    %993 = vmatprep.subr.mxu0 0.0
    %994 = vmatpush2.xpose.msra.mxu0 0.0
    %995 = vmatprep.subr.mxu0 0.0
    %996 = vmatpush2.xpose.msra.mxu0 0.0
    %997 = vmatprep.subr.mxu0 0.0
    %998 = vmatpush2.xpose.msra.mxu0 0.0
    %999 = vmatprep.subr.mxu0 0.0
    %1000 = vmatpush2.xpose.msra.mxu0 0.0
    %1001 = vmatprep.subr.mxu0 0.0
    %1002 = vmatpush2.xpose.msra.mxu0 0.0
    %1003 = vmatprep.subr.mxu0 0.0
    %1004 = vmatpush2.xpose.msra.mxu0 0.0
    %1005 = vmatprep.subr.mxu0 0.0
    %1006 = vmatpush2.xpose.msra.mxu0 0.0
    %1007 = vmatprep.subr.mxu0 0.0
    %1008 = vmatpush2.xpose.msra.mxu0 0.0
    %1009 = vmatprep.mubr.f32.mxu0 %v80
    %1010 = vmatmul.mubr.f32.gmra.mxu0 %v79
    %v1011 = vpop.f32.mrf.mxu0
    %v1012 = vadd.f32 0.0, %v1011
    %v1013 = vpop.f32.mrf.mxu0
    %1014 = vmatprep.mubr.f32.mxu0 %v82
    %1015 = vmatmul.mubr.f32.gmra.mxu0 %v81
    %v1016 = vpop.f32.mrf.mxu0
    %v1017 = vadd.f32 0.0, %v1016
    %v1018 = vpop.f32.mrf.mxu0
    %1019 = vmatprep.mubr.f32.mxu0 %v84
    %1020 = vmatmul.mubr.f32.gmra.mxu0 %v83
    %v1021 = vpop.f32.mrf.mxu0
    %v1022 = vadd.f32 0.0, %v1021
    %v1023 = vpop.f32.mrf.mxu0
    %1024 = vmatprep.mubr.f32.mxu0 %v86
    %1025 = vmatmul.mubr.f32.gmra.mxu0 %v85
    %v1026 = vpop.f32.mrf.mxu0
    %v1027 = vadd.f32 0.0, %v1026
    %v1028 = vpop.f32.mrf.mxu0
    %1029 = vdwg.mxu0
    %v1030 = vrcp.pop %v1012
    %v1031 = vrcp.pop %v1017
    %v1032 = vrcp.pop %v1022
    %v1033 = vrcp.pop %v1027
    %v1034 = vmul.f32 %v927, %v1030
    %v1035 = vmul.f32 %v932, %v1031
    %v1036 = vmul.f32 %v937, %v1032
    %v1037 = vmul.f32 %v942, %v1033
    %1039 = vset.pattern.permute.xlu0 0
    %1040 = vperm.xlu0 %1039, %v75
    %v1041 = vpop.permute.xlu0 %1040
    %1044 = vset.pattern.permute.xlu0 0
    %1045 = vperm.xlu0 %1044, %v76
    %v1046 = vpop.permute.xlu0 %1045
    %1049 = vset.pattern.permute.xlu0 0
    %1050 = vperm.xlu0 %1049, %v77
    %v1051 = vpop.permute.xlu0 %1050
    %1054 = vset.pattern.permute.xlu0 0
    %1055 = vperm.xlu0 %1054, %v78
    %v1056 = vpop.permute.xlu0 %1055
    %v1059 = vsel %vm227, %v59, 0
    %v1062 = vsel %vm227, %v60, 0
    %v1065 = vsel %vm227, %v61, 0
    %v1068 = vsel %vm227, %v62, 0
    %1070 = vmatprep.subr.mxu0 0.0
    %1071 = vmatpush1.msra.mxu0 0.0
    %1072 = vmatprep.subr.mxu0 0.0
    %1073 = vmatpush1.msra.mxu0 0.0
    %1074 = vmatprep.subr.mxu0 0.0
    %1075 = vmatpush1.msra.mxu0 0.0
    %1076 = vmatprep.subr.mxu0 0.0
    %1077 = vmatpush1.msra.mxu0 0.0
    %1078 = vmatprep.subr.mxu0 0.0
    %1079 = vmatpush1.msra.mxu0 0.0
    %1080 = vmatprep.subr.mxu0 0.0
    %1081 = vmatpush1.msra.mxu0 0.0
    %1082 = vmatprep.subr.mxu0 0.0
    %1083 = vmatpush1.msra.mxu0 0.0
    %1084 = vmatprep.subr.mxu0 0.0
    %1085 = vmatpush1.msra.mxu0 0.0
    %1086 = vmatprep.subr.mxu0 0.0
    %1087 = vmatpush1.msra.mxu0 0.0
    %1088 = vmatprep.subr.mxu0 0.0
    %1089 = vmatpush1.msra.mxu0 0.0
    %1090 = vmatprep.subr.mxu0 0.0
    %1091 = vmatpush1.msra.mxu0 0.0
    %1092 = vmatprep.subr.mxu0 0.0
    %1093 = vmatpush1.msra.mxu0 0.0
    %1094 = vmatprep.subr.mxu0 0.0
    %1095 = vmatpush1.msra.mxu0 %v1037
    %1096 = vmatprep.subr.mxu0 0.0
    %1097 = vmatpush1.msra.mxu0 %v1036
    %1098 = vmatprep.subr.mxu0 0.0
    %1099 = vmatpush1.msra.mxu0 %v1035
    %1100 = vmatprep.subr.mxu0 0.0
    %1101 = vmatpush1.msra.mxu0 %v1034
    %1102 = vmatprep.subr.mxu0 0.0
    %1103 = vmatpush2.msra.mxu0 0.0
    %1104 = vmatprep.subr.mxu0 0.0
    %1105 = vmatpush2.msra.mxu0 0.0
    %1106 = vmatprep.subr.mxu0 0.0
    %1107 = vmatpush2.msra.mxu0 0.0
    %1108 = vmatprep.subr.mxu0 0.0
    %1109 = vmatpush2.msra.mxu0 0.0
    %1110 = vmatprep.subr.mxu0 0.0
    %1111 = vmatpush2.msra.mxu0 0.0
    %1112 = vmatprep.subr.mxu0 0.0
    %1113 = vmatpush2.msra.mxu0 0.0
    %1114 = vmatprep.subr.mxu0 0.0
    %1115 = vmatpush2.msra.mxu0 0.0
    %1116 = vmatprep.subr.mxu0 0.0
    %1117 = vmatpush2.msra.mxu0 0.0
    %1118 = vmatprep.subr.mxu0 0.0
    %1119 = vmatpush2.msra.mxu0 0.0
    %1120 = vmatprep.subr.mxu0 0.0
    %1121 = vmatpush2.msra.mxu0 0.0
    %1122 = vmatprep.subr.mxu0 0.0
    %1123 = vmatpush2.msra.mxu0 0.0
    %1124 = vmatprep.subr.mxu0 0.0
    %1125 = vmatpush2.msra.mxu0 0.0
    %1126 = vmatprep.subr.mxu0 0.0
    %1127 = vmatpush2.msra.mxu0 0.0
    %1128 = vmatprep.subr.mxu0 0.0
    %1129 = vmatpush2.msra.mxu0 0.0
    %1130 = vmatprep.subr.mxu0 0.0
    %1131 = vmatpush2.msra.mxu0 0.0
    %1132 = vmatprep.subr.mxu0 0.0
    %1133 = vmatpush2.msra.mxu0 0.0
    %1134 = vmatprep.mubr.f32.mxu0 0.0
    %1135 = vmatmul.mubr.f32.gmra.mxu0 %v1059
    %v1136 = vpop.f32.mrf.mxu0
    %v1137 = vadd.f32 %v1041, %v1136
    %v1138 = vpop.f32.mrf.mxu0
    %1139 = vmatprep.mubr.f32.mxu0 0.0
    %1140 = vmatmul.mubr.f32.gmra.mxu0 %v1062
    %v1141 = vpop.f32.mrf.mxu0
    %v1142 = vadd.f32 %v1046, %v1141
    %v1143 = vpop.f32.mrf.mxu0
    %1144 = vmatprep.mubr.f32.mxu0 0.0
    %1145 = vmatmul.mubr.f32.gmra.mxu0 %v1065
    %v1146 = vpop.f32.mrf.mxu0
    %v1147 = vadd.f32 %v1051, %v1146
    %v1148 = vpop.f32.mrf.mxu0
    %1149 = vmatprep.mubr.f32.mxu0 0.0
    %1150 = vmatmul.mubr.f32.gmra.mxu0 %v1068
    %v1151 = vpop.f32.mrf.mxu0
    %v1152 = vadd.f32 %v1056, %v1151
    %v1153 = vpop.f32.mrf.mxu0
    %1154 = vdwg.mxu0
    %v1155 = vstv %s88
    %v1156 = vmul.f32 %v1137, %v1155
    %v1157 = vmul.f32 %v1142, %v1155
    %v1158 = vmul.f32 %v1147, %v1155
    %v1159 = vmul.f32 %v1152, %v1155
    %v1160 = vadd.f32 %v1156, %v89
    %v1161 = vadd.f32 %v1157, %v90
    %v1162 = vadd.f32 %v1158, %v91
    %v1163 = vadd.f32 %v1159, %v92
    %1164 = vst.msk [vmem:[#allocation3] sm:$0xff] %vm93, %v1160
    %1165 = vst.msk [vmem:[#allocation3 + $0x8] sm:$0xff] %vm93, %v1161
    %1166 = vst.msk [vmem:[#allocation3 + $0x10] sm:$0xff] %vm93, %v1162
    %1167 = vst.msk [vmem:[#allocation3 + $0x18] sm:$0xff] %vm93, %v1163
    %s1168 = scalar_lea.vmem %s0, 32
    %v1169 = vld [vmem:[%s1168] sm:$0xff]
    %v1170 = vld [vmem:[%s1168 + $0x8] sm:$0xff]
    %v1171 = vld [vmem:[%s1168 + $0x10] sm:$0xff]
    %v1172 = vld [vmem:[%s1168 + $0x18] sm:$0xff]
    %v1173 = vsel %vm93, %v1169, 0.0
    %1174 = vadd.xlane.f32.xlu0 %v1173
    %v1175 = vpop.xlane.xlu0 %1174
    %v1176 = vsel %vm93, %v1170, 0.0
    %1177 = vadd.xlane.f32.xlu0 %v1176
    %v1178 = vpop.xlane.xlu0 %1177
    %v1179 = vsel %vm93, %v1171, 0.0
    %1180 = vadd.xlane.f32.xlu0 %v1179
    %v1181 = vpop.xlane.xlu0 %1180
    %v1182 = vsel %vm93, %v1172, 0.0
    %1183 = vadd.xlane.f32.xlu0 %v1182
    %v1184 = vpop.xlane.xlu0 %1183
    %v1185 = vmul.f32 %v1175, %v106
    %v1186 = vmul.f32 %v1178, %v106
    %v1187 = vmul.f32 %v1181, %v106
    %v1188 = vmul.f32 %v1184, %v106
    %v1189 = vsub.f32 %v1169, %v1185
    %v1190 = vsub.f32 %v1170, %v1186
    %v1191 = vsub.f32 %v1171, %v1187
    %v1192 = vsub.f32 %v1172, %v1188
    %v1193 = vmul.f32 %v1189, %v1189
    %v1194 = vmul.f32 %v1190, %v1190
    %v1195 = vmul.f32 %v1191, %v1191
    %v1196 = vmul.f32 %v1192, %v1192
    %v1197 = vsel %vm93, %v1193, 0.0
    %1198 = vadd.xlane.f32.xlu0 %v1197
    %v1199 = vpop.xlane.xlu0 %1198
    %v1200 = vsel %vm93, %v1194, 0.0
    %1201 = vadd.xlane.f32.xlu0 %v1200
    %v1202 = vpop.xlane.xlu0 %1201
    %v1203 = vsel %vm93, %v1195, 0.0
    %1204 = vadd.xlane.f32.xlu0 %v1203
    %v1205 = vpop.xlane.xlu0 %1204
    %v1206 = vsel %vm93, %v1196, 0.0
    %1207 = vadd.xlane.f32.xlu0 %v1206
    %v1208 = vpop.xlane.xlu0 %1207
    %v1209 = vmul.f32 %v1199, 0.015873017
    %v1210 = vmul.f32 %v1202, 0.015873017
    %v1211 = vmul.f32 %v1205, 0.015873017
    %v1212 = vmul.f32 %v1208, 0.015873017
    %v1213 = vadd.f32 %v1209, 1e-06
    %v1214 = vadd.f32 %v1210, 1e-06
    %v1215 = vadd.f32 %v1211, 1e-06
    %v1216 = vadd.f32 %v1212, 1e-06
    %v1217 = vrsqrt.pop %v1213
    %v1218 = vrsqrt.pop %v1214
    %v1219 = vrsqrt.pop %v1215
    %v1220 = vrsqrt.pop %v1216
    %v1221 = vmul.f32 %v1189, %v1217
    %v1222 = vmul.f32 %v1190, %v1218
    %v1223 = vmul.f32 %v1191, %v1219
    %v1224 = vmul.f32 %v1192, %v1220
    %s1225 = scalar_lea.vmem %s1, 32
    %v1226 = vld [vmem:[%s1225] sm:$0xff]
    %v1227 = vld [vmem:[%s1225 + $0x8] sm:$0xff]
    %v1228 = vld [vmem:[%s1225 + $0x10] sm:$0xff]
    %v1229 = vld [vmem:[%s1225 + $0x18] sm:$0xff]
    %1231 = vset.pattern.permute.xlu0 0
    %1232 = vperm.xlu0 %1231, %v1226
    %v1233 = vpop.permute.xlu0 %1232
    %1236 = vset.pattern.permute.xlu0 0
    %1237 = vperm.xlu0 %1236, %v1227
    %v1238 = vpop.permute.xlu0 %1237
    %1241 = vset.pattern.permute.xlu0 0
    %1242 = vperm.xlu0 %1241, %v1228
    %v1243 = vpop.permute.xlu0 %1242
    %1246 = vset.pattern.permute.xlu0 0
    %1247 = vperm.xlu0 %1246, %v1229
    %v1248 = vpop.permute.xlu0 %1247
    %v1250 = vmul.f32 %v1221, %v1233
    %v1251 = vmul.f32 %v1222, %v1238
    %v1252 = vmul.f32 %v1223, %v1243
    %v1253 = vmul.f32 %v1224, %v1248
    %s1254 = scalar_lea.vmem %s2, 32
    %v1255 = vld [vmem:[%s1254] sm:$0xff]
    %v1256 = vld [vmem:[%s1254 + $0x8] sm:$0xff]
    %v1257 = vld [vmem:[%s1254 + $0x10] sm:$0xff]
    %v1258 = vld [vmem:[%s1254 + $0x18] sm:$0xff]
    %1260 = vset.pattern.permute.xlu0 0
    %1261 = vperm.xlu0 %1260, %v1255
    %v1262 = vpop.permute.xlu0 %1261
    %1265 = vset.pattern.permute.xlu0 0
    %1266 = vperm.xlu0 %1265, %v1256
    %v1267 = vpop.permute.xlu0 %1266
    %1270 = vset.pattern.permute.xlu0 0
    %1271 = vperm.xlu0 %1270, %v1257
    %v1272 = vpop.permute.xlu0 %1271
    %1275 = vset.pattern.permute.xlu0 0
    %1276 = vperm.xlu0 %1275, %v1258
    %v1277 = vpop.permute.xlu0 %1276
    %v1279 = vadd.f32 %v1250, %v1262
    %v1280 = vadd.f32 %v1251, %v1267
    %v1281 = vadd.f32 %v1252, %v1272
    %v1282 = vadd.f32 %v1253, %v1277
    %v1283 = vmax.f32 %v1279, 0.0
    %v1284 = vmax.f32 %v1280, 0.0
    %v1285 = vmax.f32 %v1281, 0.0
    %v1286 = vmax.f32 %v1282, 0.0
    %1287 = vmatprep.subr.mxu0 0.0
    %1288 = vmatpush1.msra.mxu0 0.0
    %1289 = vmatprep.subr.mxu0 0.0
    %1290 = vmatpush1.msra.mxu0 0.0
    %1291 = vmatprep.subr.mxu0 0.0
    %1292 = vmatpush1.msra.mxu0 0.0
    %1293 = vmatprep.subr.mxu0 0.0
    %1294 = vmatpush1.msra.mxu0 0.0
    %1295 = vmatprep.subr.mxu0 0.0
    %1296 = vmatpush1.msra.mxu0 0.0
    %1297 = vmatprep.subr.mxu0 0.0
    %1298 = vmatpush1.msra.mxu0 0.0
    %1299 = vmatprep.subr.mxu0 0.0
    %1300 = vmatpush1.msra.mxu0 0.0
    %1301 = vmatprep.subr.mxu0 0.0
    %1302 = vmatpush1.msra.mxu0 0.0
    %1303 = vmatprep.subr.mxu0 0.0
    %1304 = vmatpush1.msra.mxu0 0.0
    %1305 = vmatprep.subr.mxu0 0.0
    %1306 = vmatpush1.msra.mxu0 0.0
    %1307 = vmatprep.subr.mxu0 0.0
    %1308 = vmatpush1.msra.mxu0 0.0
    %1309 = vmatprep.subr.mxu0 0.0
    %1310 = vmatpush1.msra.mxu0 0.0
    %1311 = vmatprep.subr.mxu0 0.0
    %1312 = vmatpush1.msra.mxu0 %v1286
    %1313 = vmatprep.subr.mxu0 0.0
    %1314 = vmatpush1.msra.mxu0 %v1285
    %1315 = vmatprep.subr.mxu0 0.0
    %1316 = vmatpush1.msra.mxu0 %v1284
    %1317 = vmatprep.subr.mxu0 0.0
    %1318 = vmatpush1.msra.mxu0 %v1283
    %1319 = vmatprep.subr.mxu0 0.0
    %1320 = vmatpush2.msra.mxu0 0.0
    %1321 = vmatprep.subr.mxu0 0.0
    %1322 = vmatpush2.msra.mxu0 0.0
    %1323 = vmatprep.subr.mxu0 0.0
    %1324 = vmatpush2.msra.mxu0 0.0
    %1325 = vmatprep.subr.mxu0 0.0
    %1326 = vmatpush2.msra.mxu0 0.0
    %1327 = vmatprep.subr.mxu0 0.0
    %1328 = vmatpush2.msra.mxu0 0.0
    %1329 = vmatprep.subr.mxu0 0.0
    %1330 = vmatpush2.msra.mxu0 0.0
    %1331 = vmatprep.subr.mxu0 0.0
    %1332 = vmatpush2.msra.mxu0 0.0
    %1333 = vmatprep.subr.mxu0 0.0
    %1334 = vmatpush2.msra.mxu0 0.0
    %1335 = vmatprep.subr.mxu0 0.0
    %1336 = vmatpush2.msra.mxu0 0.0
    %1337 = vmatprep.subr.mxu0 0.0
    %1338 = vmatpush2.msra.mxu0 0.0
    %1339 = vmatprep.subr.mxu0 0.0
    %1340 = vmatpush2.msra.mxu0 0.0
    %1341 = vmatprep.subr.mxu0 0.0
    %1342 = vmatpush2.msra.mxu0 0.0
    %1343 = vmatprep.subr.mxu0 0.0
    %1344 = vmatpush2.msra.mxu0 0.0
    %1345 = vmatprep.subr.mxu0 0.0
    %1346 = vmatpush2.msra.mxu0 0.0
    %1347 = vmatprep.subr.mxu0 0.0
    %1348 = vmatpush2.msra.mxu0 0.0
    %1349 = vmatprep.subr.mxu0 0.0
    %1350 = vmatpush2.msra.mxu0 0.0
    %1351 = vmatprep.mubr.f32.mxu0 0.0
    %1352 = vmatmul.mubr.f32.gmra.mxu0 %v229
    %v1353 = vpop.f32.mrf.mxu0
    %v1354 = vadd.f32 %v210, %v1353
    %v1355 = vpop.f32.mrf.mxu0
    %1356 = vmatprep.mubr.f32.mxu0 0.0
    %1357 = vmatmul.mubr.f32.gmra.mxu0 %v232
    %v1358 = vpop.f32.mrf.mxu0
    %v1359 = vadd.f32 %v215, %v1358
    %v1360 = vpop.f32.mrf.mxu0
    %1361 = vmatprep.mubr.f32.mxu0 0.0
    %1362 = vmatmul.mubr.f32.gmra.mxu0 %v235
    %v1363 = vpop.f32.mrf.mxu0
    %v1364 = vadd.f32 %v220, %v1363
    %v1365 = vpop.f32.mrf.mxu0
    %1366 = vmatprep.mubr.f32.mxu0 0.0
    %1367 = vmatmul.mubr.f32.gmra.mxu0 %v238
    %v1368 = vpop.f32.mrf.mxu0
    %v1369 = vadd.f32 %v225, %v1368
    %v1370 = vpop.f32.mrf.mxu0
    %1371 = vdwg.mxu0
    %v1372 = vmul.f32 %v1354, 0.35355338
    %v1373 = vmul.f32 %v1359, 0.35355338
    %v1374 = vmul.f32 %v1364, 0.35355338
    %v1375 = vmul.f32 %v1369, 0.35355338
    %1376 = vmatprep.subr.mxu0 0.0
    %1377 = vmatpush1.msra.mxu0 0.0
    %1378 = vmatprep.subr.mxu0 0.0
    %1379 = vmatpush1.msra.mxu0 0.0
    %1380 = vmatprep.subr.mxu0 0.0
    %1381 = vmatpush1.msra.mxu0 0.0
    %1382 = vmatprep.subr.mxu0 0.0
    %1383 = vmatpush1.msra.mxu0 0.0
    %1384 = vmatprep.subr.mxu0 0.0
    %1385 = vmatpush1.msra.mxu0 0.0
    %1386 = vmatprep.subr.mxu0 0.0
    %1387 = vmatpush1.msra.mxu0 0.0
    %1388 = vmatprep.subr.mxu0 0.0
    %1389 = vmatpush1.msra.mxu0 0.0
    %1390 = vmatprep.subr.mxu0 0.0
    %1391 = vmatpush1.msra.mxu0 0.0
    %1392 = vmatprep.subr.mxu0 0.0
    %1393 = vmatpush1.msra.mxu0 0.0
    %1394 = vmatprep.subr.mxu0 0.0
    %1395 = vmatpush1.msra.mxu0 0.0
    %1396 = vmatprep.subr.mxu0 0.0
    %1397 = vmatpush1.msra.mxu0 0.0
    %1398 = vmatprep.subr.mxu0 0.0
    %1399 = vmatpush1.msra.mxu0 0.0
    %1400 = vmatprep.subr.mxu0 0.0
    %1401 = vmatpush1.msra.mxu0 %v1286
    %1402 = vmatprep.subr.mxu0 0.0
    %1403 = vmatpush1.msra.mxu0 %v1285
    %1404 = vmatprep.subr.mxu0 0.0
    %1405 = vmatpush1.msra.mxu0 %v1284
    %1406 = vmatprep.subr.mxu0 0.0
    %1407 = vmatpush1.msra.mxu0 %v1283
    %1408 = vmatprep.subr.mxu0 0.0
    %1409 = vmatpush2.msra.mxu0 0.0
    %1410 = vmatprep.subr.mxu0 0.0
    %1411 = vmatpush2.msra.mxu0 0.0
    %1412 = vmatprep.subr.mxu0 0.0
    %1413 = vmatpush2.msra.mxu0 0.0
    %1414 = vmatprep.subr.mxu0 0.0
    %1415 = vmatpush2.msra.mxu0 0.0
    %1416 = vmatprep.subr.mxu0 0.0
    %1417 = vmatpush2.msra.mxu0 0.0
    %1418 = vmatprep.subr.mxu0 0.0
    %1419 = vmatpush2.msra.mxu0 0.0
    %1420 = vmatprep.subr.mxu0 0.0
    %1421 = vmatpush2.msra.mxu0 0.0
    %1422 = vmatprep.subr.mxu0 0.0
    %1423 = vmatpush2.msra.mxu0 0.0
    %1424 = vmatprep.subr.mxu0 0.0
    %1425 = vmatpush2.msra.mxu0 0.0
    %1426 = vmatprep.subr.mxu0 0.0
    %1427 = vmatpush2.msra.mxu0 0.0
    %1428 = vmatprep.subr.mxu0 0.0
    %1429 = vmatpush2.msra.mxu0 0.0
    %1430 = vmatprep.subr.mxu0 0.0
    %1431 = vmatpush2.msra.mxu0 0.0
    %1432 = vmatprep.subr.mxu0 0.0
    %1433 = vmatpush2.msra.mxu0 0.0
    %1434 = vmatprep.subr.mxu0 0.0
    %1435 = vmatpush2.msra.mxu0 0.0
    %1436 = vmatprep.subr.mxu0 0.0
    %1437 = vmatpush2.msra.mxu0 0.0
    %1438 = vmatprep.subr.mxu0 0.0
    %1439 = vmatpush2.msra.mxu0 0.0
    %1440 = vmatprep.mubr.f32.mxu0 0.0
    %1441 = vmatmul.mubr.f32.gmra.mxu0 %v350
    %v1442 = vpop.f32.mrf.mxu0
    %v1443 = vadd.f32 %v332, %v1442
    %v1444 = vpop.f32.mrf.mxu0
    %1445 = vmatprep.mubr.f32.mxu0 0.0
    %1446 = vmatmul.mubr.f32.gmra.mxu0 %v353
    %v1447 = vpop.f32.mrf.mxu0
    %v1448 = vadd.f32 %v337, %v1447
    %v1449 = vpop.f32.mrf.mxu0
    %1450 = vmatprep.mubr.f32.mxu0 0.0
    %1451 = vmatmul.mubr.f32.gmra.mxu0 %v356
    %v1452 = vpop.f32.mrf.mxu0
    %v1453 = vadd.f32 %v342, %v1452
    %v1454 = vpop.f32.mrf.mxu0
    %1455 = vmatprep.mubr.f32.mxu0 0.0
    %1456 = vmatmul.mubr.f32.gmra.mxu0 %v359
    %v1457 = vpop.f32.mrf.mxu0
    %v1458 = vadd.f32 %v347, %v1457
    %v1459 = vpop.f32.mrf.mxu0
    %1460 = vdwg.mxu0
    %1461 = vmatprep.subr.mxu0 0.0
    %1462 = vmatpush1.msra.mxu0 0.0
    %1463 = vmatprep.subr.mxu0 0.0
    %1464 = vmatpush1.msra.mxu0 0.0
    %1465 = vmatprep.subr.mxu0 0.0
    %1466 = vmatpush1.msra.mxu0 0.0
    %1467 = vmatprep.subr.mxu0 0.0
    %1468 = vmatpush1.msra.mxu0 0.0
    %1469 = vmatprep.subr.mxu0 0.0
    %1470 = vmatpush1.msra.mxu0 0.0
    %1471 = vmatprep.subr.mxu0 0.0
    %1472 = vmatpush1.msra.mxu0 0.0
    %1473 = vmatprep.subr.mxu0 0.0
    %1474 = vmatpush1.msra.mxu0 0.0
    %1475 = vmatprep.subr.mxu0 0.0
    %1476 = vmatpush1.msra.mxu0 0.0
    %1477 = vmatprep.subr.mxu0 0.0
    %1478 = vmatpush1.msra.mxu0 0.0
    %1479 = vmatprep.subr.mxu0 0.0
    %1480 = vmatpush1.msra.mxu0 0.0
    %1481 = vmatprep.subr.mxu0 0.0
    %1482 = vmatpush1.msra.mxu0 0.0
    %1483 = vmatprep.subr.mxu0 0.0
    %1484 = vmatpush1.msra.mxu0 0.0
    %1485 = vmatprep.subr.mxu0 0.0
    %1486 = vmatpush1.msra.mxu0 %v1286
    %1487 = vmatprep.subr.mxu0 0.0
    %1488 = vmatpush1.msra.mxu0 %v1285
    %1489 = vmatprep.subr.mxu0 0.0
    %1490 = vmatpush1.msra.mxu0 %v1284
    %1491 = vmatprep.subr.mxu0 0.0
    %1492 = vmatpush1.msra.mxu0 %v1283
    %1493 = vmatprep.subr.mxu0 0.0
    %1494 = vmatpush2.msra.mxu0 0.0
    %1495 = vmatprep.subr.mxu0 0.0
    %1496 = vmatpush2.msra.mxu0 0.0
    %1497 = vmatprep.subr.mxu0 0.0
    %1498 = vmatpush2.msra.mxu0 0.0
    %1499 = vmatprep.subr.mxu0 0.0
    %1500 = vmatpush2.msra.mxu0 0.0
    %1501 = vmatprep.subr.mxu0 0.0
    %1502 = vmatpush2.msra.mxu0 0.0
    %1503 = vmatprep.subr.mxu0 0.0
    %1504 = vmatpush2.msra.mxu0 0.0
    %1505 = vmatprep.subr.mxu0 0.0
    %1506 = vmatpush2.msra.mxu0 0.0
    %1507 = vmatprep.subr.mxu0 0.0
    %1508 = vmatpush2.msra.mxu0 0.0
    %1509 = vmatprep.subr.mxu0 0.0
    %1510 = vmatpush2.msra.mxu0 0.0
    %1511 = vmatprep.subr.mxu0 0.0
    %1512 = vmatpush2.msra.mxu0 0.0
    %1513 = vmatprep.subr.mxu0 0.0
    %1514 = vmatpush2.msra.mxu0 0.0
    %1515 = vmatprep.subr.mxu0 0.0
    %1516 = vmatpush2.msra.mxu0 0.0
    %1517 = vmatprep.subr.mxu0 0.0
    %1518 = vmatpush2.msra.mxu0 0.0
    %1519 = vmatprep.subr.mxu0 0.0
    %1520 = vmatpush2.msra.mxu0 0.0
    %1521 = vmatprep.subr.mxu0 0.0
    %1522 = vmatpush2.msra.mxu0 0.0
    %1523 = vmatprep.subr.mxu0 0.0
    %1524 = vmatpush2.msra.mxu0 0.0
    %1525 = vmatprep.mubr.f32.mxu0 0.0
    %1526 = vmatmul.mubr.f32.gmra.mxu0 %v467
    %v1527 = vpop.f32.mrf.mxu0
    %v1528 = vadd.f32 %v449, %v1527
    %v1529 = vpop.f32.mrf.mxu0
    %1530 = vmatprep.mubr.f32.mxu0 0.0
    %1531 = vmatmul.mubr.f32.gmra.mxu0 %v470
    %v1532 = vpop.f32.mrf.mxu0
    %v1533 = vadd.f32 %v454, %v1532
    %v1534 = vpop.f32.mrf.mxu0
    %1535 = vmatprep.mubr.f32.mxu0 0.0
    %1536 = vmatmul.mubr.f32.gmra.mxu0 %v473
    %v1537 = vpop.f32.mrf.mxu0
    %v1538 = vadd.f32 %v459, %v1537
    %v1539 = vpop.f32.mrf.mxu0
    %1540 = vmatprep.mubr.f32.mxu0 0.0
    %1541 = vmatmul.mubr.f32.gmra.mxu0 %v476
    %v1542 = vpop.f32.mrf.mxu0
    %v1543 = vadd.f32 %v464, %v1542
    %v1544 = vpop.f32.mrf.mxu0
    %1545 = vdwg.mxu0
    %1550 = vrot.lane.b32.xlu0 %v1443, 64
    %v1551 = vpop.permute.xlu0 %1550
    %1552 = vrot.lane.b32.xlu0 %v1448, 64
    %v1553 = vpop.permute.xlu0 %1552
    %1554 = vrot.lane.b32.xlu0 %v1453, 64
    %v1555 = vpop.permute.xlu0 %1554
    %1556 = vrot.lane.b32.xlu0 %v1458, 64
    %v1557 = vpop.permute.xlu0 %1556
    %v1562 = vsel %vm93, %v1443, %v1551
    %v1563 = vsel %vm93, %v1448, %v1553
    %v1564 = vsel %vm93, %v1453, %v1555
    %v1565 = vsel %vm93, %v1458, %v1557
    %v1566 = vmul.f32 %v1562, %v79
    %v1567 = vmul.f32 %v1562, %v80
    %v1568 = vmul.f32 %v1563, %v81
    %v1569 = vmul.f32 %v1563, %v82
    %v1570 = vmul.f32 %v1564, %v83
    %v1571 = vmul.f32 %v1564, %v84
    %v1572 = vmul.f32 %v1565, %v85
    %v1573 = vmul.f32 %v1565, %v86
    %1578 = vrot.lane.b32.xlu0 %v1528, 64
    %v1579 = vpop.permute.xlu0 %1578
    %1580 = vrot.lane.b32.xlu0 %v1533, 64
    %v1581 = vpop.permute.xlu0 %1580
    %1582 = vrot.lane.b32.xlu0 %v1538, 64
    %v1583 = vpop.permute.xlu0 %1582
    %1584 = vrot.lane.b32.xlu0 %v1543, 64
    %v1585 = vpop.permute.xlu0 %1584
    %v1590 = vsel %vm93, %v1528, %v1579
    %v1591 = vsel %vm93, %v1533, %v1581
    %v1592 = vsel %vm93, %v1538, %v1583
    %v1593 = vsel %vm93, %v1543, %v1585
    %v1594 = vmul.f32 %v1590, %v79
    %v1595 = vmul.f32 %v1590, %v80
    %v1596 = vmul.f32 %v1591, %v81
    %v1597 = vmul.f32 %v1591, %v82
    %v1598 = vmul.f32 %v1592, %v83
    %v1599 = vmul.f32 %v1592, %v84
    %v1600 = vmul.f32 %v1593, %v85
    %v1601 = vmul.f32 %v1593, %v86
    %1602 = vxpose.xlu0.b32.start [1/16] %v1372, 128
    %1603 = vxpose.xlu0.b32.cont [2/16] %v1373, 128
    %1604 = vxpose.xlu0.b32.cont [3/16] %v1374, 128
    %1605 = vxpose.xlu0.b32.cont [4/16] %v1375, 128
    %1606 = vxpose.xlu0.b32.cont [5/16] 0.0, 128
    %1607 = vxpose.xlu0.b32.cont [6/16] 0.0, 128
    %1608 = vxpose.xlu0.b32.cont [7/16] 0.0, 128
    %1609 = vxpose.xlu0.b32.cont [8/16] 0.0, 128
    %1610 = vxpose.xlu0.b32.cont [9/16] 0.0, 128
    %1611 = vxpose.xlu0.b32.cont [10/16] 0.0, 128
    %1612 = vxpose.xlu0.b32.cont [11/16] 0.0, 128
    %1613 = vxpose.xlu0.b32.cont [12/16] 0.0, 128
    %1614 = vxpose.xlu0.b32.cont [13/16] 0.0, 128
    %1615 = vxpose.xlu0.b32.cont [14/16] 0.0, 128
    %1616 = vxpose.xlu0.b32.cont [15/16] 0.0, 128
    %1617 = vxpose.xlu0.b32.end [16/16] 0.0, 128
    %v1618 = vpop.trf.xlu0
    %v1619 = vpop.trf.xlu0
    %v1620 = vpop.trf.xlu0
    %v1621 = vpop.trf.xlu0
    %v1622 = vpop.trf.xlu0
    %v1623 = vpop.trf.xlu0
    %v1624 = vpop.trf.xlu0
    %v1625 = vpop.trf.xlu0
    %v1626 = vpop.trf.xlu0
    %v1627 = vpop.trf.xlu0
    %v1628 = vpop.trf.xlu0
    %v1629 = vpop.trf.xlu0
    %v1630 = vpop.trf.xlu0
    %v1631 = vpop.trf.xlu0
    %v1632 = vpop.trf.xlu0
    %v1633 = vpop.trf.xlu0
    %v1635 = vsel %vm227, %v1618, 0
    %v1638 = vsel %vm227, %v1619, 0
    %v1641 = vsel %vm227, %v1620, 0
    %v1644 = vsel %vm227, %v1621, 0
    %v1647 = vsel %vm227, %v1622, 0
    %v1650 = vsel %vm227, %v1623, 0
    %v1653 = vsel %vm227, %v1624, 0
    %v1656 = vsel %vm227, %v1625, 0
    %1658 = vmatprep.subr.mxu0 0.0
    %1659 = vmatpush1.msra.mxu0 0.0
    %1660 = vmatprep.subr.mxu0 0.0
    %1661 = vmatpush1.msra.mxu0 0.0
    %1662 = vmatprep.subr.mxu0 0.0
    %1663 = vmatpush1.msra.mxu0 0.0
    %1664 = vmatprep.subr.mxu0 0.0
    %1665 = vmatpush1.msra.mxu0 0.0
    %1666 = vmatprep.subr.mxu0 0.0
    %1667 = vmatpush1.msra.mxu0 0.0
    %1668 = vmatprep.subr.mxu0 0.0
    %1669 = vmatpush1.msra.mxu0 0.0
    %1670 = vmatprep.subr.mxu0 0.0
    %1671 = vmatpush1.msra.mxu0 0.0
    %1672 = vmatprep.subr.mxu0 0.0
    %1673 = vmatpush1.msra.mxu0 0.0
    %1674 = vmatprep.subr.mxu0 0.0
    %1675 = vmatpush1.msra.mxu0 0.0
    %1676 = vmatprep.subr.mxu0 0.0
    %1677 = vmatpush1.msra.mxu0 0.0
    %1678 = vmatprep.subr.mxu0 0.0
    %1679 = vmatpush1.msra.mxu0 0.0
    %1680 = vmatprep.subr.mxu0 0.0
    %1681 = vmatpush1.msra.mxu0 0.0
    %1682 = vmatprep.subr.mxu0 %v1573
    %1683 = vmatpush1.msra.mxu0 %v1572
    %1684 = vmatprep.subr.mxu0 %v1571
    %1685 = vmatpush1.msra.mxu0 %v1570
    %1686 = vmatprep.subr.mxu0 %v1569
    %1687 = vmatpush1.msra.mxu0 %v1568
    %1688 = vmatprep.subr.mxu0 %v1567
    %1689 = vmatpush1.msra.mxu0 %v1566
    %1690 = vmatprep.subr.mxu0 0.0
    %1691 = vmatpush2.msra.mxu0 0.0
    %1692 = vmatprep.subr.mxu0 0.0
    %1693 = vmatpush2.msra.mxu0 0.0
    %1694 = vmatprep.subr.mxu0 0.0
    %1695 = vmatpush2.msra.mxu0 0.0
    %1696 = vmatprep.subr.mxu0 0.0
    %1697 = vmatpush2.msra.mxu0 0.0
    %1698 = vmatprep.subr.mxu0 0.0
    %1699 = vmatpush2.msra.mxu0 0.0
    %1700 = vmatprep.subr.mxu0 0.0
    %1701 = vmatpush2.msra.mxu0 0.0
    %1702 = vmatprep.subr.mxu0 0.0
    %1703 = vmatpush2.msra.mxu0 0.0
    %1704 = vmatprep.subr.mxu0 0.0
    %1705 = vmatpush2.msra.mxu0 0.0
    %1706 = vmatprep.subr.mxu0 0.0
    %1707 = vmatpush2.msra.mxu0 0.0
    %1708 = vmatprep.subr.mxu0 0.0
    %1709 = vmatpush2.msra.mxu0 0.0
    %1710 = vmatprep.subr.mxu0 0.0
    %1711 = vmatpush2.msra.mxu0 0.0
    %1712 = vmatprep.subr.mxu0 0.0
    %1713 = vmatpush2.msra.mxu0 0.0
    %1714 = vmatprep.subr.mxu0 0.0
    %1715 = vmatpush2.msra.mxu0 0.0
    %1716 = vmatprep.subr.mxu0 0.0
    %1717 = vmatpush2.msra.mxu0 0.0
    %1718 = vmatprep.subr.mxu0 0.0
    %1719 = vmatpush2.msra.mxu0 0.0
    %1720 = vmatprep.subr.mxu0 0.0
    %1721 = vmatpush2.msra.mxu0 0.0
    %1722 = vmatprep.mubr.f32.mxu0 0.0
    %1723 = vmatmul.mubr.f32.gmra.mxu0 %v1635
    %v1724 = vpop.f32.mrf.mxu0
    %v1725 = vadd.f32 0.0, %v1724
    %v1726 = vpop.f32.mrf.mxu0
    %v1727 = vadd.f32 0.0, %v1726
    %1728 = vmatprep.mubr.f32.mxu0 0.0
    %1729 = vmatmul.mubr.f32.gmra.mxu0 %v1638
    %v1730 = vpop.f32.mrf.mxu0
    %v1731 = vadd.f32 0.0, %v1730
    %v1732 = vpop.f32.mrf.mxu0
    %v1733 = vadd.f32 0.0, %v1732
    %1734 = vmatprep.mubr.f32.mxu0 0.0
    %1735 = vmatmul.mubr.f32.gmra.mxu0 %v1641
    %v1736 = vpop.f32.mrf.mxu0
    %v1737 = vadd.f32 0.0, %v1736
    %v1738 = vpop.f32.mrf.mxu0
    %v1739 = vadd.f32 0.0, %v1738
    %1740 = vmatprep.mubr.f32.mxu0 0.0
    %1741 = vmatmul.mubr.f32.gmra.mxu0 %v1644
    %v1742 = vpop.f32.mrf.mxu0
    %v1743 = vadd.f32 0.0, %v1742
    %v1744 = vpop.f32.mrf.mxu0
    %v1745 = vadd.f32 0.0, %v1744
    %1746 = vmatprep.mubr.f32.mxu0 0.0
    %1747 = vmatmul.mubr.f32.gmra.mxu0 %v1647
    %v1748 = vpop.f32.mrf.mxu0
    %v1749 = vadd.f32 0.0, %v1748
    %v1750 = vpop.f32.mrf.mxu0
    %v1751 = vadd.f32 0.0, %v1750
    %1752 = vmatprep.mubr.f32.mxu0 0.0
    %1753 = vmatmul.mubr.f32.gmra.mxu0 %v1650
    %v1754 = vpop.f32.mrf.mxu0
    %v1755 = vadd.f32 0.0, %v1754
    %v1756 = vpop.f32.mrf.mxu0
    %v1757 = vadd.f32 0.0, %v1756
    %1758 = vmatprep.mubr.f32.mxu0 0.0
    %1759 = vmatmul.mubr.f32.gmra.mxu0 %v1653
    %v1760 = vpop.f32.mrf.mxu0
    %v1761 = vadd.f32 0.0, %v1760
    %v1762 = vpop.f32.mrf.mxu0
    %v1763 = vadd.f32 0.0, %v1762
    %1764 = vmatprep.mubr.f32.mxu0 0.0
    %1765 = vmatmul.mubr.f32.gmra.mxu0 %v1656
    %v1766 = vpop.f32.mrf.mxu0
    %v1767 = vadd.f32 0.0, %v1766
    %v1768 = vpop.f32.mrf.mxu0
    %v1769 = vadd.f32 0.0, %v1768
    %1770 = vdwg.mxu0
    %v1771 = vmax.f32 %v1725, %v1727
    %1772 = vmax.xlane.f32.xlu0 %v1771
    %v1773 = vpop.xlane.xlu0 %1772
    %v1774 = vmax.f32 %v1731, %v1733
    %1775 = vmax.xlane.f32.xlu0 %v1774
    %v1776 = vpop.xlane.xlu0 %1775
    %v1777 = vmax.f32 %v1737, %v1739
    %1778 = vmax.xlane.f32.xlu0 %v1777
    %v1779 = vpop.xlane.xlu0 %1778
    %v1780 = vmax.f32 %v1743, %v1745
    %1781 = vmax.xlane.f32.xlu0 %v1780
    %v1782 = vpop.xlane.xlu0 %1781
    %v1783 = vmax.f32 %v1749, %v1751
    %1784 = vmax.xlane.f32.xlu0 %v1783
    %v1785 = vpop.xlane.xlu0 %1784
    %v1786 = vmax.f32 %v1755, %v1757
    %1787 = vmax.xlane.f32.xlu0 %v1786
    %v1788 = vpop.xlane.xlu0 %1787
    %v1789 = vmax.f32 %v1761, %v1763
    %1790 = vmax.xlane.f32.xlu0 %v1789
    %v1791 = vpop.xlane.xlu0 %1790
    %v1792 = vmax.f32 %v1767, %v1769
    %1793 = vmax.xlane.f32.xlu0 %v1792
    %v1794 = vpop.xlane.xlu0 %1793
    %v1795 = vsub.f32 %v1725, %v1773
    %v1796 = vsub.f32 %v1727, %v1773
    %v1797 = vsub.f32 %v1731, %v1776
    %v1798 = vsub.f32 %v1733, %v1776
    %v1799 = vsub.f32 %v1737, %v1779
    %v1800 = vsub.f32 %v1739, %v1779
    %v1801 = vsub.f32 %v1743, %v1782
    %v1802 = vsub.f32 %v1745, %v1782
    %v1803 = vsub.f32 %v1749, %v1785
    %v1804 = vsub.f32 %v1751, %v1785
    %v1805 = vsub.f32 %v1755, %v1788
    %v1806 = vsub.f32 %v1757, %v1788
    %v1807 = vsub.f32 %v1761, %v1791
    %v1808 = vsub.f32 %v1763, %v1791
    %v1809 = vsub.f32 %v1767, %v1794
    %v1810 = vsub.f32 %v1769, %v1794
    %v1811 = vmul.f32 %v1795, 1.442695
    %v1812 = vpow.pop %v1811
    %v1813 = vmul.f32 %v1796, 1.442695
    %v1814 = vpow.pop %v1813
    %v1815 = vmul.f32 %v1797, 1.442695
    %v1816 = vpow.pop %v1815
    %v1817 = vmul.f32 %v1798, 1.442695
    %v1818 = vpow.pop %v1817
    %v1819 = vmul.f32 %v1799, 1.442695
    %v1820 = vpow.pop %v1819
    %v1821 = vmul.f32 %v1800, 1.442695
    %v1822 = vpow.pop %v1821
    %v1823 = vmul.f32 %v1801, 1.442695
    %v1824 = vpow.pop %v1823
    %v1825 = vmul.f32 %v1802, 1.442695
    %v1826 = vpow.pop %v1825
    %v1827 = vmul.f32 %v1803, 1.442695
    %v1828 = vpow.pop %v1827
    %v1829 = vmul.f32 %v1804, 1.442695
    %v1830 = vpow.pop %v1829
    %v1831 = vmul.f32 %v1805, 1.442695
    %v1832 = vpow.pop %v1831
    %v1833 = vmul.f32 %v1806, 1.442695
    %v1834 = vpow.pop %v1833
    %v1835 = vmul.f32 %v1807, 1.442695
    %v1836 = vpow.pop %v1835
    %v1837 = vmul.f32 %v1808, 1.442695
    %v1838 = vpow.pop %v1837
    %v1839 = vmul.f32 %v1809, 1.442695
    %v1840 = vpow.pop %v1839
    %v1841 = vmul.f32 %v1810, 1.442695
    %v1842 = vpow.pop %v1841
    %1843 = vmatprep.subr.mxu0 0.0
    %1844 = vmatpush1.xpose.msra.mxu0 0.0
    %1845 = vmatprep.subr.mxu0 0.0
    %1846 = vmatpush1.xpose.msra.mxu0 0.0
    %1847 = vmatprep.subr.mxu0 0.0
    %1848 = vmatpush1.xpose.msra.mxu0 0.0
    %1849 = vmatprep.subr.mxu0 0.0
    %1850 = vmatpush1.xpose.msra.mxu0 0.0
    %1851 = vmatprep.subr.mxu0 0.0
    %1852 = vmatpush1.xpose.msra.mxu0 0.0
    %1853 = vmatprep.subr.mxu0 0.0
    %1854 = vmatpush1.xpose.msra.mxu0 0.0
    %1855 = vmatprep.subr.mxu0 0.0
    %1856 = vmatpush1.xpose.msra.mxu0 0.0
    %1857 = vmatprep.subr.mxu0 0.0
    %1858 = vmatpush1.xpose.msra.mxu0 0.0
    %1859 = vmatprep.subr.mxu0 %v1842
    %1860 = vmatpush1.xpose.msra.mxu0 %v1840
    %1861 = vmatprep.subr.mxu0 %v1838
    %1862 = vmatpush1.xpose.msra.mxu0 %v1836
    %1863 = vmatprep.subr.mxu0 %v1834
    %1864 = vmatpush1.xpose.msra.mxu0 %v1832
    %1865 = vmatprep.subr.mxu0 %v1830
    %1866 = vmatpush1.xpose.msra.mxu0 %v1828
    %1867 = vmatprep.subr.mxu0 %v1826
    %1868 = vmatpush1.xpose.msra.mxu0 %v1824
    %1869 = vmatprep.subr.mxu0 %v1822
    %1870 = vmatpush1.xpose.msra.mxu0 %v1820
    %1871 = vmatprep.subr.mxu0 %v1818
    %1872 = vmatpush1.xpose.msra.mxu0 %v1816
    %1873 = vmatprep.subr.mxu0 %v1814
    %1874 = vmatpush1.xpose.msra.mxu0 %v1812
    %1875 = vmatprep.subr.mxu0 0.0
    %1876 = vmatpush2.xpose.msra.mxu0 0.0
    %1877 = vmatprep.subr.mxu0 0.0
    %1878 = vmatpush2.xpose.msra.mxu0 0.0
    %1879 = vmatprep.subr.mxu0 0.0
    %1880 = vmatpush2.xpose.msra.mxu0 0.0
    %1881 = vmatprep.subr.mxu0 0.0
    %1882 = vmatpush2.xpose.msra.mxu0 0.0
    %1883 = vmatprep.subr.mxu0 0.0
    %1884 = vmatpush2.xpose.msra.mxu0 0.0
    %1885 = vmatprep.subr.mxu0 0.0
    %1886 = vmatpush2.xpose.msra.mxu0 0.0
    %1887 = vmatprep.subr.mxu0 0.0
    %1888 = vmatpush2.xpose.msra.mxu0 0.0
    %1889 = vmatprep.subr.mxu0 0.0
    %1890 = vmatpush2.xpose.msra.mxu0 0.0
    %1891 = vmatprep.subr.mxu0 0.0
    %1892 = vmatpush2.xpose.msra.mxu0 0.0
    %1893 = vmatprep.subr.mxu0 0.0
    %1894 = vmatpush2.xpose.msra.mxu0 0.0
    %1895 = vmatprep.subr.mxu0 0.0
    %1896 = vmatpush2.xpose.msra.mxu0 0.0
    %1897 = vmatprep.subr.mxu0 0.0
    %1898 = vmatpush2.xpose.msra.mxu0 0.0
    %1899 = vmatprep.subr.mxu0 0.0
    %1900 = vmatpush2.xpose.msra.mxu0 0.0
    %1901 = vmatprep.subr.mxu0 0.0
    %1902 = vmatpush2.xpose.msra.mxu0 0.0
    %1903 = vmatprep.subr.mxu0 0.0
    %1904 = vmatpush2.xpose.msra.mxu0 0.0
    %1905 = vmatprep.subr.mxu0 0.0
    %1906 = vmatpush2.xpose.msra.mxu0 0.0
    %1907 = vmatprep.mubr.f32.mxu0 %v1595
    %1908 = vmatmul.mubr.f32.gmra.mxu0 %v1594
    %v1909 = vpop.f32.mrf.mxu0
    %v1910 = vadd.f32 0.0, %v1909
    %v1911 = vpop.f32.mrf.mxu0
    %1912 = vmatprep.mubr.f32.mxu0 %v1597
    %1913 = vmatmul.mubr.f32.gmra.mxu0 %v1596
    %v1914 = vpop.f32.mrf.mxu0
    %v1915 = vadd.f32 0.0, %v1914
    %v1916 = vpop.f32.mrf.mxu0
    %1917 = vmatprep.mubr.f32.mxu0 %v1599
    %1918 = vmatmul.mubr.f32.gmra.mxu0 %v1598
    %v1919 = vpop.f32.mrf.mxu0
    %v1920 = vadd.f32 0.0, %v1919
    %v1921 = vpop.f32.mrf.mxu0
    %1922 = vmatprep.mubr.f32.mxu0 %v1601
    %1923 = vmatmul.mubr.f32.gmra.mxu0 %v1600
    %v1924 = vpop.f32.mrf.mxu0
    %v1925 = vadd.f32 0.0, %v1924
    %v1926 = vpop.f32.mrf.mxu0
    %1927 = vdwg.mxu0
    %1928 = vmatprep.subr.mxu0 0.0
    %1929 = vmatpush1.xpose.msra.mxu0 0.0
    %1930 = vmatprep.subr.mxu0 0.0
    %1931 = vmatpush1.xpose.msra.mxu0 0.0
    %1932 = vmatprep.subr.mxu0 0.0
    %1933 = vmatpush1.xpose.msra.mxu0 0.0
    %1934 = vmatprep.subr.mxu0 0.0
    %1935 = vmatpush1.xpose.msra.mxu0 0.0
    %1936 = vmatprep.subr.mxu0 0.0
    %1937 = vmatpush1.xpose.msra.mxu0 0.0
    %1938 = vmatprep.subr.mxu0 0.0
    %1939 = vmatpush1.xpose.msra.mxu0 0.0
    %1940 = vmatprep.subr.mxu0 0.0
    %1941 = vmatpush1.xpose.msra.mxu0 0.0
    %1942 = vmatprep.subr.mxu0 0.0
    %1943 = vmatpush1.xpose.msra.mxu0 0.0
    %1944 = vmatprep.subr.mxu0 %v1842
    %1945 = vmatpush1.xpose.msra.mxu0 %v1840
    %1946 = vmatprep.subr.mxu0 %v1838
    %1947 = vmatpush1.xpose.msra.mxu0 %v1836
    %1948 = vmatprep.subr.mxu0 %v1834
    %1949 = vmatpush1.xpose.msra.mxu0 %v1832
    %1950 = vmatprep.subr.mxu0 %v1830
    %1951 = vmatpush1.xpose.msra.mxu0 %v1828
    %1952 = vmatprep.subr.mxu0 %v1826
    %1953 = vmatpush1.xpose.msra.mxu0 %v1824
    %1954 = vmatprep.subr.mxu0 %v1822
    %1955 = vmatpush1.xpose.msra.mxu0 %v1820
    %1956 = vmatprep.subr.mxu0 %v1818
    %1957 = vmatpush1.xpose.msra.mxu0 %v1816
    %1958 = vmatprep.subr.mxu0 %v1814
    %1959 = vmatpush1.xpose.msra.mxu0 %v1812
    %1960 = vmatprep.subr.mxu0 0.0
    %1961 = vmatpush2.xpose.msra.mxu0 0.0
    %1962 = vmatprep.subr.mxu0 0.0
    %1963 = vmatpush2.xpose.msra.mxu0 0.0
    %1964 = vmatprep.subr.mxu0 0.0
    %1965 = vmatpush2.xpose.msra.mxu0 0.0
    %1966 = vmatprep.subr.mxu0 0.0
    %1967 = vmatpush2.xpose.msra.mxu0 0.0
    %1968 = vmatprep.subr.mxu0 0.0
    %1969 = vmatpush2.xpose.msra.mxu0 0.0
    %1970 = vmatprep.subr.mxu0 0.0
    %1971 = vmatpush2.xpose.msra.mxu0 0.0
    %1972 = vmatprep.subr.mxu0 0.0
    %1973 = vmatpush2.xpose.msra.mxu0 0.0
    %1974 = vmatprep.subr.mxu0 0.0
    %1975 = vmatpush2.xpose.msra.mxu0 0.0
    %1976 = vmatprep.subr.mxu0 0.0
    %1977 = vmatpush2.xpose.msra.mxu0 0.0
    %1978 = vmatprep.subr.mxu0 0.0
    %1979 = vmatpush2.xpose.msra.mxu0 0.0
    %1980 = vmatprep.subr.mxu0 0.0
    %1981 = vmatpush2.xpose.msra.mxu0 0.0
    %1982 = vmatprep.subr.mxu0 0.0
    %1983 = vmatpush2.xpose.msra.mxu0 0.0
    %1984 = vmatprep.subr.mxu0 0.0
    %1985 = vmatpush2.xpose.msra.mxu0 0.0
    %1986 = vmatprep.subr.mxu0 0.0
    %1987 = vmatpush2.xpose.msra.mxu0 0.0
    %1988 = vmatprep.subr.mxu0 0.0
    %1989 = vmatpush2.xpose.msra.mxu0 0.0
    %1990 = vmatprep.subr.mxu0 0.0
    %1991 = vmatpush2.xpose.msra.mxu0 0.0
    %1992 = vmatprep.mubr.f32.mxu0 %v80
    %1993 = vmatmul.mubr.f32.gmra.mxu0 %v79
    %v1994 = vpop.f32.mrf.mxu0
    %v1995 = vadd.f32 0.0, %v1994
    %v1996 = vpop.f32.mrf.mxu0
    %1997 = vmatprep.mubr.f32.mxu0 %v82
    %1998 = vmatmul.mubr.f32.gmra.mxu0 %v81
    %v1999 = vpop.f32.mrf.mxu0
    %v2000 = vadd.f32 0.0, %v1999
    %v2001 = vpop.f32.mrf.mxu0
    %2002 = vmatprep.mubr.f32.mxu0 %v84
    %2003 = vmatmul.mubr.f32.gmra.mxu0 %v83
    %v2004 = vpop.f32.mrf.mxu0
    %v2005 = vadd.f32 0.0, %v2004
    %v2006 = vpop.f32.mrf.mxu0
    %2007 = vmatprep.mubr.f32.mxu0 %v86
    %2008 = vmatmul.mubr.f32.gmra.mxu0 %v85
    %v2009 = vpop.f32.mrf.mxu0
    %v2010 = vadd.f32 0.0, %v2009
    %v2011 = vpop.f32.mrf.mxu0
    %2012 = vdwg.mxu0
    %v2013 = vrcp.pop %v1995
    %v2014 = vrcp.pop %v2000
    %v2015 = vrcp.pop %v2005
    %v2016 = vrcp.pop %v2010
    %v2017 = vmul.f32 %v1910, %v2013
    %v2018 = vmul.f32 %v1915, %v2014
    %v2019 = vmul.f32 %v1920, %v2015
    %v2020 = vmul.f32 %v1925, %v2016
    %2021 = vmatprep.subr.mxu0 0.0
    %2022 = vmatpush1.msra.mxu0 0.0
    %2023 = vmatprep.subr.mxu0 0.0
    %2024 = vmatpush1.msra.mxu0 0.0
    %2025 = vmatprep.subr.mxu0 0.0
    %2026 = vmatpush1.msra.mxu0 0.0
    %2027 = vmatprep.subr.mxu0 0.0
    %2028 = vmatpush1.msra.mxu0 0.0
    %2029 = vmatprep.subr.mxu0 0.0
    %2030 = vmatpush1.msra.mxu0 0.0
    %2031 = vmatprep.subr.mxu0 0.0
    %2032 = vmatpush1.msra.mxu0 0.0
    %2033 = vmatprep.subr.mxu0 0.0
    %2034 = vmatpush1.msra.mxu0 0.0
    %2035 = vmatprep.subr.mxu0 0.0
    %2036 = vmatpush1.msra.mxu0 0.0
    %2037 = vmatprep.subr.mxu0 0.0
    %2038 = vmatpush1.msra.mxu0 0.0
    %2039 = vmatprep.subr.mxu0 0.0
    %2040 = vmatpush1.msra.mxu0 0.0
    %2041 = vmatprep.subr.mxu0 0.0
    %2042 = vmatpush1.msra.mxu0 0.0
    %2043 = vmatprep.subr.mxu0 0.0
    %2044 = vmatpush1.msra.mxu0 0.0
    %2045 = vmatprep.subr.mxu0 0.0
    %2046 = vmatpush1.msra.mxu0 %v2020
    %2047 = vmatprep.subr.mxu0 0.0
    %2048 = vmatpush1.msra.mxu0 %v2019
    %2049 = vmatprep.subr.mxu0 0.0
    %2050 = vmatpush1.msra.mxu0 %v2018
    %2051 = vmatprep.subr.mxu0 0.0
    %2052 = vmatpush1.msra.mxu0 %v2017
    %2053 = vmatprep.subr.mxu0 0.0
    %2054 = vmatpush2.msra.mxu0 0.0
    %2055 = vmatprep.subr.mxu0 0.0
    %2056 = vmatpush2.msra.mxu0 0.0
    %2057 = vmatprep.subr.mxu0 0.0
    %2058 = vmatpush2.msra.mxu0 0.0
    %2059 = vmatprep.subr.mxu0 0.0
    %2060 = vmatpush2.msra.mxu0 0.0
    %2061 = vmatprep.subr.mxu0 0.0
    %2062 = vmatpush2.msra.mxu0 0.0
    %2063 = vmatprep.subr.mxu0 0.0
    %2064 = vmatpush2.msra.mxu0 0.0
    %2065 = vmatprep.subr.mxu0 0.0
    %2066 = vmatpush2.msra.mxu0 0.0
    %2067 = vmatprep.subr.mxu0 0.0
    %2068 = vmatpush2.msra.mxu0 0.0
    %2069 = vmatprep.subr.mxu0 0.0
    %2070 = vmatpush2.msra.mxu0 0.0
    %2071 = vmatprep.subr.mxu0 0.0
    %2072 = vmatpush2.msra.mxu0 0.0
    %2073 = vmatprep.subr.mxu0 0.0
    %2074 = vmatpush2.msra.mxu0 0.0
    %2075 = vmatprep.subr.mxu0 0.0
    %2076 = vmatpush2.msra.mxu0 0.0
    %2077 = vmatprep.subr.mxu0 0.0
    %2078 = vmatpush2.msra.mxu0 0.0
    %2079 = vmatprep.subr.mxu0 0.0
    %2080 = vmatpush2.msra.mxu0 0.0
    %2081 = vmatprep.subr.mxu0 0.0
    %2082 = vmatpush2.msra.mxu0 0.0
    %2083 = vmatprep.subr.mxu0 0.0
    %2084 = vmatpush2.msra.mxu0 0.0
    %2085 = vmatprep.mubr.f32.mxu0 0.0
    %2086 = vmatmul.mubr.f32.gmra.mxu0 %v1059
    %v2087 = vpop.f32.mrf.mxu0
    %v2088 = vadd.f32 %v1041, %v2087
    %v2089 = vpop.f32.mrf.mxu0
    %2090 = vmatprep.mubr.f32.mxu0 0.0
    %2091 = vmatmul.mubr.f32.gmra.mxu0 %v1062
    %v2092 = vpop.f32.mrf.mxu0
    %v2093 = vadd.f32 %v1046, %v2092
    %v2094 = vpop.f32.mrf.mxu0
    %2095 = vmatprep.mubr.f32.mxu0 0.0
    %2096 = vmatmul.mubr.f32.gmra.mxu0 %v1065
    %v2097 = vpop.f32.mrf.mxu0
    %v2098 = vadd.f32 %v1051, %v2097
    %v2099 = vpop.f32.mrf.mxu0
    %2100 = vmatprep.mubr.f32.mxu0 0.0
    %2101 = vmatmul.mubr.f32.gmra.mxu0 %v1068
    %v2102 = vpop.f32.mrf.mxu0
    %v2103 = vadd.f32 %v1056, %v2102
    %v2104 = vpop.f32.mrf.mxu0
    %2105 = vdwg.mxu0
    %v2106 = vmul.f32 %v2088, %v1155
    %v2107 = vmul.f32 %v2093, %v1155
    %v2108 = vmul.f32 %v2098, %v1155
    %v2109 = vmul.f32 %v2103, %v1155
    %v2110 = vadd.f32 %v2106, %v1169
    %v2111 = vadd.f32 %v2107, %v1170
    %v2112 = vadd.f32 %v2108, %v1171
    %v2113 = vadd.f32 %v2109, %v1172
    %s2114 = scalar_lea.vmem [#allocation3], 32
    %2115 = vst.msk [vmem:[%s2114] sm:$0xff] %vm93, %v2110
    %2116 = vst.msk [vmem:[%s2114 + $0x8] sm:$0xff] %vm93, %v2111
    %2117 = vst.msk [vmem:[%s2114 + $0x10] sm:$0xff] %vm93, %v2112
    %2118 = vst.msk [vmem:[%s2114 + $0x18] sm:$0xff] %vm93, %v2113
    // Predicated region
    $region54: #{tpu_custom_call.1} parent=1 // pred_check
      _
    $region55: #{tpu_custom_call.1} parent=1 // pred_check_branch
      %2120 = sbr.rel (0) target = $region57
    $region56: #{tpu_custom_call.1} parent=1 // pred_region
      %s2122 = ssub.s32 1024, 1024
      %2123 = vsyncadd [#allocation4], %s2122
      %s2124 = sshll.u32 [#allocation3], 4
      %s2125 = int_to_ptr.vmem [resolvable:$true] %s2124
      %2130 = dma.vmem_to_hbm [thread:$0]  %s2125, 1024, %s13, [#allocation4], 128, 128, 8
    $region57: #{tpu_custom_call.1} parent=1 // pred_fallthru
      _
    // Predicated region
    $region58: #{tpu_custom_call.1} parent=1 // pred_check
      _
    $region59: #{tpu_custom_call.1} parent=1 // pred_check_branch
      %2132 = sbr.rel (0) target = $region61
    $region60: #{tpu_custom_call.1} parent=1 // pred_region
      %2133 = dma.done [#allocation4], 1024
    $region61: #{tpu_custom_call.1} parent=1 // pred_fallthru
      _
    %2134 = vsyncpa [#allocation4], 1

</llo_original>
